<compile_context>
chip_gen: v7x
topology: tpu7x:2x2x1
jax: 0.10.0
libtpu: 0.0.40
codegen_flags: <defaults>
</compile_context>

<pallas_src>
import functools
import math

import jax
import jax.numpy as jnp
from jax.experimental import pallas as pl
from jax.experimental.pallas import tpu as pltpu


def _round_up(x, m):
    return ((x + m - 1) // m) * m


# ------------------------------ fused kernel -------------------------------

def _fused_forward_kernel(x_ref, ev_ref, pre_w_ref, pre_b_ref,
                          w_d_ref, w_ff2_ref, lb_ref, out_ref,
                          *, S, D, FF, nhead, num_layers, eps):
    f32 = jnp.float32
    bf16 = jnp.bfloat16
    dh = D // nhead
    scale = 1.0 / math.sqrt(dh)
    P = x_ref.shape[-1]                       # common padded lane width

    def mm(a, b):
        # bf16 MXU operands, f32 accumulation.
        return jnp.dot(a.astype(bf16), b.astype(bf16),
                       preferred_element_type=f32)

    def layer_norm(y, g, b):
        mu = jnp.mean(y, axis=-1, keepdims=True)
        var = jnp.mean(jnp.square(y - mu), axis=-1, keepdims=True)
        return (y - mu) * jax.lax.rsqrt(var + eps) * g + b

    x_in = x_ref[0]                           # (S, P) f32, lanes >= N*F are 0
    ev = ev_ref[0]                            # (1, P) f32, lanes >= E are 0

    # ---- GNN: ReLU(A_norm @ X @ W + b); adjacency folded into the weight ----
    gnn = jnp.maximum(mm(x_in, pre_w_ref[0]) + pre_b_ref[0:1, :], 0.0)   # (S, P)

    # ---- input embedding; event_fc folded into the event half of emb_w; the
    #      per-batch event row is broadcast over S timesteps by a plain add ----
    x = mm(gnn, pre_w_ref[1]) + mm(ev, pre_w_ref[2]) + pre_b_ref[1:2, :]  # (S, P)
    if P != D:
        x = x[:, :D]

    # 0/1 lane masks selecting each head's dh-wide slice of the model dim.
    lane = jax.lax.broadcasted_iota(jnp.int32, (1, D), 1)
    head_masks = [((lane >= h * dh) & (lane < (h + 1) * dh)).astype(f32)
                  for h in range(nhead)]

    # ---- transformer encoder (post-LN, ReLU FF, no dropout) ----
    for l in range(num_layers):
        wqkv = w_d_ref[l, :, 0:3 * D]                  # (D, 3D) bf16
        wo = w_d_ref[l, :, 3 * D:4 * D]                # (D, D)
        wff1 = w_d_ref[l, :, 4 * D:4 * D + FF]         # (D, FF)
        wff2 = w_ff2_ref[l]                            # (FF, D)
        b_qkv = lb_ref[l, 0:1, 0:3 * D]
        b_o = lb_ref[l, 1:2, 0:D]
        g1 = lb_ref[l, 2:3, 0:D]
        b1 = lb_ref[l, 3:4, 0:D]
        b_ff1 = lb_ref[l, 4:5, 0:FF]
        b_ff2 = lb_ref[l, 5:6, 0:D]
        g2 = lb_ref[l, 6:7, 0:D]
        b2 = lb_ref[l, 7:8, 0:D]

        qkv = mm(x, wqkv) + b_qkv                      # (S, 3D) f32
        q = qkv[:, 0:D] * scale
        k = qkv[:, D:2 * D].astype(bf16)
        v = qkv[:, 2 * D:3 * D]

        # Full-width multi-head attention: mask q/v lanes per head instead of
        # slicing 8-lane columns; QK^T contracts the last dims (no k.T).
        attn = None
        for h in range(nhead):
            qh = (q * head_masks[h]).astype(bf16)                 # (S, D)
            s = jax.lax.dot_general(qh, k, (((1,), (1,)), ((), ())),
                                    preferred_element_type=f32)   # (S, S)
            s = s - jnp.max(s, axis=-1, keepdims=True)
            p = jnp.exp(s)
            p = p * pl.reciprocal(jnp.sum(p, axis=-1, keepdims=True),
                                  approx=True)
            vh = (v * head_masks[h]).astype(bf16)                 # (S, D)
            o = jnp.dot(p.astype(bf16), vh, preferred_element_type=f32)
            attn = o if attn is None else attn + o                # (S, D)

        x = layer_norm(x + mm(attn, wo) + b_o, g1, b1)
        ff = jnp.maximum(mm(x, wff1) + b_ff1, 0.0)
        x = layer_norm(x + mm(ff, wff2) + b_ff2, g2, b2)

    # ---- last time step (static row slice) + predictor head ----
    last = x[S - 1:S, :]                                          # (1, D)
    out = mm(last, pre_w_ref[3, 0:D, :]) + pre_b_ref[2:3, :]      # (1, P)
    out_ref[0] = out.astype(out_ref.dtype)


# ------------------------------ parameters --------------------------------

def _dense(key, in_dim, out_dim, scale=0.05):
    kw, kb = jax.random.split(key)
    w = scale * jax.random.normal(kw, (in_dim, out_dim), jnp.float32)
    b = scale * jax.random.normal(kb, (out_dim,), jnp.float32)
    return w, b


def init_params(key, cfg):
    N = cfg["num_nodes"]
    F = cfg["gnn_in_dim"]
    H = cfg["gnn_hidden_dim"]
    D = cfg["transformer_dim"]
    FF = cfg["dim_feedforward"]
    E = cfg["event_dim"]
    keys = jax.random.split(key, 8 + cfg["num_layers"])

    params = {}
    params["gnn_w"], params["gnn_b"] = _dense(keys[0], F, H)
    params["event_w"], params["event_b"] = _dense(keys[1], E, D)
    params["emb_w"], params["emb_b"] = _dense(keys[2], N * H + D, D)
    params["pred_w"], params["pred_b"] = _dense(keys[3], D, N * F)

    layers = []
    for l in range(cfg["num_layers"]):
        lk = jax.random.split(keys[8 + l], 4)
        lp = {}
        lp["w_qkv"], lp["b_qkv"] = _dense(lk[0], D, 3 * D)
        lp["w_o"], lp["b_o"] = _dense(lk[1], D, D)
        lp["w_ff1"], lp["b_ff1"] = _dense(lk[2], D, FF)
        lp["w_ff2"], lp["b_ff2"] = _dense(lk[3], FF, D)
        lp["ln1_g"] = jnp.ones((D,), jnp.float32)
        lp["ln1_b"] = jnp.zeros((D,), jnp.float32)
        lp["ln2_g"] = jnp.ones((D,), jnp.float32)
        lp["ln2_b"] = jnp.zeros((D,), jnp.float32)
        layers.append(lp)
    params["layers"] = layers
    return params


def normalized_adjacency(edge_index, num_nodes):
    src = edge_index[0]
    dst = edge_index[1]
    a = jnp.zeros((num_nodes, num_nodes), jnp.float32)
    a = a.at[dst, src].set(1.0)
    idx = jnp.arange(num_nodes)
    a = a.at[idx, idx].set(1.0)          # self loops (diag forced to exactly 1)
    deg = jnp.sum(a, axis=1)
    dinv = jax.lax.rsqrt(deg)
    return a * dinv[:, None] * dinv[None, :]


# ------------------------------ forward pass ------------------------------

def traffic_flow_predictor_forward(params, traffic_x, edge_index, event_emb, cfg):
    B, S, N, F = traffic_x.shape
    H = cfg["gnn_hidden_dim"]
    D = cfg["transformer_dim"]
    FF = cfg["dim_feedforward"]
    E = cfg["event_dim"]
    L = cfg["num_layers"]
    nhead = cfg["nhead"]
    NH, NF = N * H, N * F
    f32, bf16 = jnp.float32, jnp.bfloat16

    # Common padded lane width for the small pre/post operands.
    P = _round_up(max(NF, NH, E, D), 8)

    # ---- fold & pack weights host-side (plain XLA, once per jit trace) ----
    a_norm = normalized_adjacency(edge_index, N)                  # (N, N)
    gnn_big_w = jnp.kron(a_norm.T, params["gnn_w"])               # (N*F, N*H)
    gnn_big_b = jnp.tile(params["gnn_b"], N)                      # (N*H,)
    emb_wg = params["emb_w"][:NH]                                 # (N*H, D)
    emb_we = params["emb_w"][NH:]                                 # (D, D)
    ev_comb_w = params["event_w"] @ emb_we                        # (E, D) fold
    comb_b = params["event_b"] @ emb_we + params["emb_b"]         # (D,)

    pre_w = jnp.zeros((4, P, P), f32)
    pre_w = pre_w.at[0, :NF, :NH].set(gnn_big_w)
    pre_w = pre_w.at[1, :NH, :D].set(emb_wg)
    pre_w = pre_w.at[2, :E, :D].set(ev_comb_w)
    pre_w = pre_w.at[3, :D, :NF].set(params["pred_w"])
    pre_w = pre_w.astype(bf16)

    pre_b = jnp.zeros((8, P), f32)
    pre_b = pre_b.at[0, :NH].set(gnn_big_b)
    pre_b = pre_b.at[1, :D].set(comb_b)
    pre_b = pre_b.at[2, :NF].set(params["pred_b"])

    w_d_all = jnp.stack([
        jnp.concatenate([lp["w_qkv"], lp["w_o"], lp["w_ff1"]], axis=1)
        for lp in params["layers"]]).astype(bf16)                 # (L, D, 4D+FF)
    w_ff2_all = jnp.stack(
        [lp["w_ff2"] for lp in params["layers"]]).astype(bf16)    # (L, FF, D)

    LBW = max(3 * D, FF)
    layer_b = jnp.zeros((L, 8, LBW), f32)
    for i, lp in enumerate(params["layers"]):
        layer_b = layer_b.at[i, 0, :3 * D].set(lp["b_qkv"])
        layer_b = layer_b.at[i, 1, :D].set(lp["b_o"])
        layer_b = layer_b.at[i, 2, :D].set(lp["ln1_g"])
        layer_b = layer_b.at[i, 3, :D].set(lp["ln1_b"])
        layer_b = layer_b.at[i, 4, :FF].set(lp["b_ff1"])
        layer_b = layer_b.at[i, 5, :D].set(lp["b_ff2"])
        layer_b = layer_b.at[i, 6, :D].set(lp["ln2_g"])
        layer_b = layer_b.at[i, 7, :D].set(lp["ln2_b"])

    # ---- activations, zero-padded to the common lane width P ----
    x_pad = jnp.zeros((B, S, P), f32).at[:, :, :NF].set(
        traffic_x.reshape(B, S, NF).astype(f32))
    ev_pad = jnp.zeros((B, 1, P), f32).at[:, 0, :E].set(event_emb.astype(f32))

    kernel = functools.partial(
        _fused_forward_kernel,
        S=S, D=D, FF=FF, nhead=nhead, num_layers=L, eps=1e-5)

    def const_spec(a):
        return pl.BlockSpec(a.shape, lambda b: (0,) * a.ndim)

    out = pl.pallas_call(
        kernel,
        grid=(B,),
        in_specs=[
            pl.BlockSpec((1, S, P), lambda b: (b, 0, 0)),     # x_pad
            pl.BlockSpec((1, 1, P), lambda b: (b, 0, 0)),     # ev_pad
            const_spec(pre_w), const_spec(pre_b),
            const_spec(w_d_all), const_spec(w_ff2_all), const_spec(layer_b),
        ],
        out_specs=pl.BlockSpec((1, 1, P), lambda b: (b, 0, 0)),
        out_shape=jax.ShapeDtypeStruct((B, 1, P), f32),
        compiler_params=pltpu.CompilerParams(
            dimension_semantics=("parallel",)),
    )(x_pad, ev_pad, pre_w, pre_b, w_d_all, w_ff2_all, layer_b)

    return out[:, 0, :NF].reshape(B, N, F)


# ---------------------------------- main -----------------------------------

if __name__ == "__main__":
    cfg = dict(
        gnn_in_dim=4, gnn_hidden_dim=8, event_dim=16, transformer_dim=32,
        nhead=4, num_layers=2, seq_len=8, pred_len=1,
        num_nodes=4, dim_feedforward=64,
    )
    batch = 2

    kx, ke = jax.random.split(jax.random.PRNGKey(0))
    traffic_x = jax.random.normal(
        kx, (batch, cfg["seq_len"], cfg["num_nodes"], cfg["gnn_in_dim"]),
        jnp.float32)
    event_emb = jax.random.normal(ke, (batch, cfg["event_dim"]), jnp.float32)
    edge_index = jnp.array([[0, 1, 2, 3, 1, 2, 3, 0],
                            [1, 2, 3, 0, 0, 1, 2, 3]], jnp.int32)

    params = init_params(jax.random.PRNGKey(42), cfg)

    fwd = jax.jit(lambda p, tx, ei, ee:
                  traffic_flow_predictor_forward(p, tx, ei, ee, cfg))
    out = fwd(params, traffic_x, edge_index, event_emb)
    out = jax.block_until_ready(out)

    assert out.shape == (batch, cfg["num_nodes"], cfg["gnn_in_dim"]), out.shape
    assert jnp.all(jnp.isfinite(out))
    print("KERNEL_OK")
</pallas_src>

<mosaic_0001>
module attributes {stable_mosaic.version = 11 : i64} {
  func.func @_fused_forward_kernel(%arg0: i32, %arg1: memref<1x8x32xf32, #tpu.memory_space<vmem>>, %arg2: memref<1x1x32xf32, #tpu.memory_space<vmem>>, %arg3: memref<4x32x32xbf16, #tpu.memory_space<vmem>>, %arg4: memref<8x32xf32, #tpu.memory_space<vmem>>, %arg5: memref<2x32x192xbf16, #tpu.memory_space<vmem>>, %arg6: memref<2x64x32xbf16, #tpu.memory_space<vmem>>, %arg7: memref<2x8x96xf32, #tpu.memory_space<vmem>>, %arg8: memref<1x1x32xf32, #tpu.memory_space<vmem>>) attributes {dimension_semantics = [#tpu.dimension_semantics<parallel>], iteration_bounds = array<i64: 2>, scalar_prefetch = 0 : i64, scratch_operands = 0 : i64, tpu.core_type = #tpu.core_type<tc>, window_params = [{transform_indices = @transform_0, window_bounds = array<i64: 1, 8, 32>}, {transform_indices = @transform_1, window_bounds = array<i64: 1, 1, 32>}, {pipeline_mode = #tpu.pipeline_mode<synchronous>, transform_indices = @transform_2, window_bounds = array<i64: 4, 32, 32>}, {pipeline_mode = #tpu.pipeline_mode<synchronous>, transform_indices = @transform_3, window_bounds = array<i64: 8, 32>}, {pipeline_mode = #tpu.pipeline_mode<synchronous>, transform_indices = @transform_4, window_bounds = array<i64: 2, 32, 192>}, {pipeline_mode = #tpu.pipeline_mode<synchronous>, transform_indices = @transform_5, window_bounds = array<i64: 2, 64, 32>}, {pipeline_mode = #tpu.pipeline_mode<synchronous>, transform_indices = @transform_6, window_bounds = array<i64: 2, 8, 96>}, {transform_indices = @transform_7, window_bounds = array<i64: 1, 1, 32>}]} {
    %c0 = arith.constant 0 : index
    %c0_0 = arith.constant 0 : index
    %c0_1 = arith.constant 0 : index
    %0 = vector.load %arg1[%c0, %c0_0, %c0_1] : memref<1x8x32xf32, #tpu.memory_space<vmem>>, vector<1x8x32xf32>
    %1 = vector.shape_cast %0 : vector<1x8x32xf32> to vector<8x32xf32>
    %c0_2 = arith.constant 0 : index
    %c0_3 = arith.constant 0 : index
    %c0_4 = arith.constant 0 : index
    %2 = vector.load %arg2[%c0_2, %c0_3, %c0_4] : memref<1x1x32xf32, #tpu.memory_space<vmem>>, vector<1x1x32xf32>
    %3 = vector.shape_cast %2 : vector<1x1x32xf32> to vector<1x32xf32>
    %c0_5 = arith.constant 0 : index
    %c0_6 = arith.constant 0 : index
    %c0_7 = arith.constant 0 : index
    %4 = vector.load %arg3[%c0_5, %c0_6, %c0_7] : memref<4x32x32xbf16, #tpu.memory_space<vmem>>, vector<1x32x32xbf16>
    %5 = vector.shape_cast %4 : vector<1x32x32xbf16> to vector<32x32xbf16>
    %6 = arith.truncf %1 : vector<8x32xf32> to vector<8x32xbf16>
    %cst = arith.constant dense<0.000000e+00> : vector<8x32xf32>
    %7 = tpu.matmul %6, %5, %cst {dimension_numbers = #tpu.dot_dimension_numbers<[1], [0], [0], [1], [0, 0, 1, 1], [], []>} : vector<8x32xbf16>, vector<32x32xbf16>, vector<8x32xf32> -> vector<8x32xf32>
    %c0_8 = arith.constant 0 : index
    %c0_9 = arith.constant 0 : index
    %8 = vector.load %arg4[%c0_8, %c0_9] : memref<8x32xf32, #tpu.memory_space<vmem>>, vector<1x32xf32>
    %9 = vector.broadcast %8 : vector<1x32xf32> to vector<8x32xf32>
    %10 = arith.addf %7, %9 : vector<8x32xf32>
    %cst_10 = arith.constant 0.000000e+00 : f32
    %11 = vector.broadcast %cst_10 : f32 to vector<8x32xf32>
    %12 = arith.maximumf %10, %11 : vector<8x32xf32>
    %c1 = arith.constant 1 : index
    %c0_11 = arith.constant 0 : index
    %c0_12 = arith.constant 0 : index
    %13 = vector.load %arg3[%c1, %c0_11, %c0_12] : memref<4x32x32xbf16, #tpu.memory_space<vmem>>, vector<1x32x32xbf16>
    %14 = vector.shape_cast %13 : vector<1x32x32xbf16> to vector<32x32xbf16>
    %15 = arith.truncf %12 : vector<8x32xf32> to vector<8x32xbf16>
    %cst_13 = arith.constant dense<0.000000e+00> : vector<8x32xf32>
    %16 = tpu.matmul %15, %14, %cst_13 {dimension_numbers = #tpu.dot_dimension_numbers<[1], [0], [0], [1], [0, 0, 1, 1], [], []>} : vector<8x32xbf16>, vector<32x32xbf16>, vector<8x32xf32> -> vector<8x32xf32>
    %c2 = arith.constant 2 : index
    %c0_14 = arith.constant 0 : index
    %c0_15 = arith.constant 0 : index
    %17 = vector.load %arg3[%c2, %c0_14, %c0_15] : memref<4x32x32xbf16, #tpu.memory_space<vmem>>, vector<1x32x32xbf16>
    %18 = vector.shape_cast %17 : vector<1x32x32xbf16> to vector<32x32xbf16>
    %19 = arith.truncf %3 : vector<1x32xf32> to vector<1x32xbf16>
    %cst_16 = arith.constant dense<0.000000e+00> : vector<1x32xf32>
    %20 = tpu.matmul %19, %18, %cst_16 {dimension_numbers = #tpu.dot_dimension_numbers<[1], [0], [0], [1], [0, 0, 1, 1], [], []>} : vector<1x32xbf16>, vector<32x32xbf16>, vector<1x32xf32> -> vector<1x32xf32>
    %21 = vector.broadcast %20 : vector<1x32xf32> to vector<8x32xf32>
    %22 = arith.addf %16, %21 : vector<8x32xf32>
    %c1_17 = arith.constant 1 : index
    %c0_18 = arith.constant 0 : index
    %23 = vector.load %arg4[%c1_17, %c0_18] : memref<8x32xf32, #tpu.memory_space<vmem>>, vector<1x32xf32>
    %24 = vector.broadcast %23 : vector<1x32xf32> to vector<8x32xf32>
    %25 = arith.addf %22, %24 : vector<8x32xf32>
    %26 = tpu.iota {dimensions = array<i32: 1>} : vector<1x32xi32>
    %c0_i32 = arith.constant 0 : i32
    %27 = vector.broadcast %c0_i32 : i32 to vector<1x32xi32>
    %28 = arith.cmpi sge, %26, %27 : vector<1x32xi32>
    %c8_i32 = arith.constant 8 : i32
    %29 = vector.broadcast %c8_i32 : i32 to vector<1x32xi32>
    %30 = arith.cmpi slt, %26, %29 : vector<1x32xi32>
    %31 = arith.andi %28, %30 : vector<1x32xi1>
    %32 = arith.extui %31 : vector<1x32xi1> to vector<1x32xi32>
    %33 = arith.sitofp %32 : vector<1x32xi32> to vector<1x32xf32>
    %c8_i32_19 = arith.constant 8 : i32
    %34 = vector.broadcast %c8_i32_19 : i32 to vector<1x32xi32>
    %35 = arith.cmpi sge, %26, %34 : vector<1x32xi32>
    %c16_i32 = arith.constant 16 : i32
    %36 = vector.broadcast %c16_i32 : i32 to vector<1x32xi32>
    %37 = arith.cmpi slt, %26, %36 : vector<1x32xi32>
    %38 = arith.andi %35, %37 : vector<1x32xi1>
    %39 = arith.extui %38 : vector<1x32xi1> to vector<1x32xi32>
    %40 = arith.sitofp %39 : vector<1x32xi32> to vector<1x32xf32>
    %c16_i32_20 = arith.constant 16 : i32
    %41 = vector.broadcast %c16_i32_20 : i32 to vector<1x32xi32>
    %42 = arith.cmpi sge, %26, %41 : vector<1x32xi32>
    %c24_i32 = arith.constant 24 : i32
    %43 = vector.broadcast %c24_i32 : i32 to vector<1x32xi32>
    %44 = arith.cmpi slt, %26, %43 : vector<1x32xi32>
    %45 = arith.andi %42, %44 : vector<1x32xi1>
    %46 = arith.extui %45 : vector<1x32xi1> to vector<1x32xi32>
    %47 = arith.sitofp %46 : vector<1x32xi32> to vector<1x32xf32>
    %c24_i32_21 = arith.constant 24 : i32
    %48 = vector.broadcast %c24_i32_21 : i32 to vector<1x32xi32>
    %49 = arith.cmpi sge, %26, %48 : vector<1x32xi32>
    %c32_i32 = arith.constant 32 : i32
    %50 = vector.broadcast %c32_i32 : i32 to vector<1x32xi32>
    %51 = arith.cmpi slt, %26, %50 : vector<1x32xi32>
    %52 = arith.andi %49, %51 : vector<1x32xi1>
    %53 = arith.extui %52 : vector<1x32xi1> to vector<1x32xi32>
    %54 = arith.sitofp %53 : vector<1x32xi32> to vector<1x32xf32>
    %c0_22 = arith.constant 0 : index
    %c0_23 = arith.constant 0 : index
    %c0_24 = arith.constant 0 : index
    %55 = vector.load %arg5[%c0_22, %c0_23, %c0_24] : memref<2x32x192xbf16, #tpu.memory_space<vmem>>, vector<1x32x96xbf16>
    %56 = vector.shape_cast %55 : vector<1x32x96xbf16> to vector<32x96xbf16>
    %c0_25 = arith.constant 0 : index
    %c0_26 = arith.constant 0 : index
    %c96 = arith.constant 96 : index
    %57 = vector.load %arg5[%c0_25, %c0_26, %c96] : memref<2x32x192xbf16, #tpu.memory_space<vmem>>, vector<1x32x32xbf16>
    %58 = vector.shape_cast %57 : vector<1x32x32xbf16> to vector<32x32xbf16>
    %c0_27 = arith.constant 0 : index
    %c0_28 = arith.constant 0 : index
    %c128 = arith.constant 128 : index
    %59 = vector.load %arg5[%c0_27, %c0_28, %c128] : memref<2x32x192xbf16, #tpu.memory_space<vmem>>, vector<1x32x64xbf16>
    %60 = vector.shape_cast %59 : vector<1x32x64xbf16> to vector<32x64xbf16>
    %c0_29 = arith.constant 0 : index
    %c0_30 = arith.constant 0 : index
    %c0_31 = arith.constant 0 : index
    %61 = vector.load %arg6[%c0_29, %c0_30, %c0_31] : memref<2x64x32xbf16, #tpu.memory_space<vmem>>, vector<1x64x32xbf16>
    %62 = vector.shape_cast %61 : vector<1x64x32xbf16> to vector<64x32xbf16>
    %c0_32 = arith.constant 0 : index
    %c0_33 = arith.constant 0 : index
    %c0_34 = arith.constant 0 : index
    %63 = vector.load %arg7[%c0_32, %c0_33, %c0_34] : memref<2x8x96xf32, #tpu.memory_space<vmem>>, vector<1x1x96xf32>
    %64 = vector.shape_cast %63 : vector<1x1x96xf32> to vector<1x96xf32>
    %c0_35 = arith.constant 0 : index
    %c1_36 = arith.constant 1 : index
    %c0_37 = arith.constant 0 : index
    %65 = vector.load %arg7[%c0_35, %c1_36, %c0_37] : memref<2x8x96xf32, #tpu.memory_space<vmem>>, vector<1x1x32xf32>
    %66 = vector.shape_cast %65 : vector<1x1x32xf32> to vector<1x32xf32>
    %c0_38 = arith.constant 0 : index
    %c2_39 = arith.constant 2 : index
    %c0_40 = arith.constant 0 : index
    %67 = vector.load %arg7[%c0_38, %c2_39, %c0_40] : memref<2x8x96xf32, #tpu.memory_space<vmem>>, vector<1x1x32xf32>
    %68 = vector.shape_cast %67 : vector<1x1x32xf32> to vector<1x32xf32>
    %c0_41 = arith.constant 0 : index
    %c3 = arith.constant 3 : index
    %c0_42 = arith.constant 0 : index
    %69 = vector.load %arg7[%c0_41, %c3, %c0_42] : memref<2x8x96xf32, #tpu.memory_space<vmem>>, vector<1x1x32xf32>
    %70 = vector.shape_cast %69 : vector<1x1x32xf32> to vector<1x32xf32>
    %c0_43 = arith.constant 0 : index
    %c4 = arith.constant 4 : index
    %c0_44 = arith.constant 0 : index
    %71 = vector.load %arg7[%c0_43, %c4, %c0_44] : memref<2x8x96xf32, #tpu.memory_space<vmem>>, vector<1x1x64xf32>
    %72 = vector.shape_cast %71 : vector<1x1x64xf32> to vector<1x64xf32>
    %c0_45 = arith.constant 0 : index
    %c5 = arith.constant 5 : index
    %c0_46 = arith.constant 0 : index
    %73 = vector.load %arg7[%c0_45, %c5, %c0_46] : memref<2x8x96xf32, #tpu.memory_space<vmem>>, vector<1x1x32xf32>
    %74 = vector.shape_cast %73 : vector<1x1x32xf32> to vector<1x32xf32>
    %c0_47 = arith.constant 0 : index
    %c6 = arith.constant 6 : index
    %c0_48 = arith.constant 0 : index
    %75 = vector.load %arg7[%c0_47, %c6, %c0_48] : memref<2x8x96xf32, #tpu.memory_space<vmem>>, vector<1x1x32xf32>
    %76 = vector.shape_cast %75 : vector<1x1x32xf32> to vector<1x32xf32>
    %c0_49 = arith.constant 0 : index
    %c7 = arith.constant 7 : index
    %c0_50 = arith.constant 0 : index
    %77 = vector.load %arg7[%c0_49, %c7, %c0_50] : memref<2x8x96xf32, #tpu.memory_space<vmem>>, vector<1x1x32xf32>
    %78 = vector.shape_cast %77 : vector<1x1x32xf32> to vector<1x32xf32>
    %79 = arith.truncf %25 : vector<8x32xf32> to vector<8x32xbf16>
    %cst_51 = arith.constant dense<0.000000e+00> : vector<8x96xf32>
    %80 = tpu.matmul %79, %56, %cst_51 {dimension_numbers = #tpu.dot_dimension_numbers<[1], [0], [0], [1], [0, 0, 1, 1], [], []>} : vector<8x32xbf16>, vector<32x96xbf16>, vector<8x96xf32> -> vector<8x96xf32>
    %81 = vector.broadcast %64 : vector<1x96xf32> to vector<8x96xf32>
    %82 = arith.addf %80, %81 : vector<8x96xf32>
    %83 = vector.extract_strided_slice %82 {offsets = [0, 0], sizes = [8, 32], strides = [1, 1]} : vector<8x96xf32> to vector<8x32xf32>
    %cst_52 = arith.constant 0.353553385 : f32
    %84 = vector.broadcast %cst_52 : f32 to vector<8x32xf32>
    %85 = arith.mulf %83, %84 : vector<8x32xf32>
    %86 = vector.extract_strided_slice %82 {offsets = [0, 32], sizes = [8, 32], strides = [1, 1]} : vector<8x96xf32> to vector<8x32xf32>
    %87 = arith.truncf %86 : vector<8x32xf32> to vector<8x32xbf16>
    %88 = vector.extract_strided_slice %82 {offsets = [0, 64], sizes = [8, 32], strides = [1, 1]} : vector<8x96xf32> to vector<8x32xf32>
    %89 = vector.broadcast %33 : vector<1x32xf32> to vector<8x32xf32>
    %90 = arith.mulf %85, %89 : vector<8x32xf32>
    %91 = arith.truncf %90 : vector<8x32xf32> to vector<8x32xbf16>
    %cst_53 = arith.constant dense<0.000000e+00> : vector<8x8xf32>
    %92 = tpu.matmul %91, %87, %cst_53 {dimension_numbers = #tpu.dot_dimension_numbers<[1], [1], [0], [0], [0, 0, 1, 0], [], []>} : vector<8x32xbf16>, vector<8x32xbf16>, vector<8x8xf32> -> vector<8x8xf32>
    %cst_54 = arith.constant dense<0xFF800000> : vector<8xf32>
    %93 = vector.multi_reduction <maximumf>, %92, %cst_54 [1] : vector<8x8xf32> to vector<8xf32>
    %94 = vector.shape_cast %93 : vector<8xf32> to vector<8x1xf32>
    %95 = vector.broadcast %94 : vector<8x1xf32> to vector<8x8xf32>
    %96 = arith.subf %92, %95 : vector<8x8xf32>
    %97 = math.exp %96 : vector<8x8xf32>
    %cst_55 = arith.constant dense<0.000000e+00> : vector<8xf32>
    %98 = vector.multi_reduction <add>, %97, %cst_55 [1] : vector<8x8xf32> to vector<8xf32>
    %99 = vector.shape_cast %98 : vector<8xf32> to vector<8x1xf32>
    %100 = tpu.reciprocal %99 {approx = true} : vector<8x1xf32> -> vector<8x1xf32>
    %101 = vector.broadcast %100 : vector<8x1xf32> to vector<8x8xf32>
    %102 = arith.mulf %97, %101 : vector<8x8xf32>
    %103 = vector.broadcast %33 : vector<1x32xf32> to vector<8x32xf32>
    %104 = arith.mulf %88, %103 : vector<8x32xf32>
    %105 = arith.truncf %104 : vector<8x32xf32> to vector<8x32xbf16>
    %106 = arith.truncf %102 : vector<8x8xf32> to vector<8x8xbf16>
    %cst_56 = arith.constant dense<0.000000e+00> : vector<8x32xf32>
    %107 = tpu.matmul %106, %105, %cst_56 {dimension_numbers = #tpu.dot_dimension_numbers<[1], [0], [0], [1], [0, 0, 1, 1], [], []>} : vector<8x8xbf16>, vector<8x32xbf16>, vector<8x32xf32> -> vector<8x32xf32>
    %108 = vector.broadcast %40 : vector<1x32xf32> to vector<8x32xf32>
    %109 = arith.mulf %85, %108 : vector<8x32xf32>
    %110 = arith.truncf %109 : vector<8x32xf32> to vector<8x32xbf16>
    %cst_57 = arith.constant dense<0.000000e+00> : vector<8x8xf32>
    %111 = tpu.matmul %110, %87, %cst_57 {dimension_numbers = #tpu.dot_dimension_numbers<[1], [1], [0], [0], [0, 0, 1, 0], [], []>} : vector<8x32xbf16>, vector<8x32xbf16>, vector<8x8xf32> -> vector<8x8xf32>
    %cst_58 = arith.constant dense<0xFF800000> : vector<8xf32>
    %112 = vector.multi_reduction <maximumf>, %111, %cst_58 [1] : vector<8x8xf32> to vector<8xf32>
    %113 = vector.shape_cast %112 : vector<8xf32> to vector<8x1xf32>
    %114 = vector.broadcast %113 : vector<8x1xf32> to vector<8x8xf32>
    %115 = arith.subf %111, %114 : vector<8x8xf32>
    %116 = math.exp %115 : vector<8x8xf32>
    %cst_59 = arith.constant dense<0.000000e+00> : vector<8xf32>
    %117 = vector.multi_reduction <add>, %116, %cst_59 [1] : vector<8x8xf32> to vector<8xf32>
    %118 = vector.shape_cast %117 : vector<8xf32> to vector<8x1xf32>
    %119 = tpu.reciprocal %118 {approx = true} : vector<8x1xf32> -> vector<8x1xf32>
    %120 = vector.broadcast %119 : vector<8x1xf32> to vector<8x8xf32>
    %121 = arith.mulf %116, %120 : vector<8x8xf32>
    %122 = vector.broadcast %40 : vector<1x32xf32> to vector<8x32xf32>
    %123 = arith.mulf %88, %122 : vector<8x32xf32>
    %124 = arith.truncf %123 : vector<8x32xf32> to vector<8x32xbf16>
    %125 = arith.truncf %121 : vector<8x8xf32> to vector<8x8xbf16>
    %cst_60 = arith.constant dense<0.000000e+00> : vector<8x32xf32>
    %126 = tpu.matmul %125, %124, %cst_60 {dimension_numbers = #tpu.dot_dimension_numbers<[1], [0], [0], [1], [0, 0, 1, 1], [], []>} : vector<8x8xbf16>, vector<8x32xbf16>, vector<8x32xf32> -> vector<8x32xf32>
    %127 = arith.addf %107, %126 : vector<8x32xf32>
    %128 = vector.broadcast %47 : vector<1x32xf32> to vector<8x32xf32>
    %129 = arith.mulf %85, %128 : vector<8x32xf32>
    %130 = arith.truncf %129 : vector<8x32xf32> to vector<8x32xbf16>
    %cst_61 = arith.constant dense<0.000000e+00> : vector<8x8xf32>
    %131 = tpu.matmul %130, %87, %cst_61 {dimension_numbers = #tpu.dot_dimension_numbers<[1], [1], [0], [0], [0, 0, 1, 0], [], []>} : vector<8x32xbf16>, vector<8x32xbf16>, vector<8x8xf32> -> vector<8x8xf32>
    %cst_62 = arith.constant dense<0xFF800000> : vector<8xf32>
    %132 = vector.multi_reduction <maximumf>, %131, %cst_62 [1] : vector<8x8xf32> to vector<8xf32>
    %133 = vector.shape_cast %132 : vector<8xf32> to vector<8x1xf32>
    %134 = vector.broadcast %133 : vector<8x1xf32> to vector<8x8xf32>
    %135 = arith.subf %131, %134 : vector<8x8xf32>
    %136 = math.exp %135 : vector<8x8xf32>
    %cst_63 = arith.constant dense<0.000000e+00> : vector<8xf32>
    %137 = vector.multi_reduction <add>, %136, %cst_63 [1] : vector<8x8xf32> to vector<8xf32>
    %138 = vector.shape_cast %137 : vector<8xf32> to vector<8x1xf32>
    %139 = tpu.reciprocal %138 {approx = true} : vector<8x1xf32> -> vector<8x1xf32>
    %140 = vector.broadcast %139 : vector<8x1xf32> to vector<8x8xf32>
    %141 = arith.mulf %136, %140 : vector<8x8xf32>
    %142 = vector.broadcast %47 : vector<1x32xf32> to vector<8x32xf32>
    %143 = arith.mulf %88, %142 : vector<8x32xf32>
    %144 = arith.truncf %143 : vector<8x32xf32> to vector<8x32xbf16>
    %145 = arith.truncf %141 : vector<8x8xf32> to vector<8x8xbf16>
    %cst_64 = arith.constant dense<0.000000e+00> : vector<8x32xf32>
    %146 = tpu.matmul %145, %144, %cst_64 {dimension_numbers = #tpu.dot_dimension_numbers<[1], [0], [0], [1], [0, 0, 1, 1], [], []>} : vector<8x8xbf16>, vector<8x32xbf16>, vector<8x32xf32> -> vector<8x32xf32>
    %147 = arith.addf %127, %146 : vector<8x32xf32>
    %148 = vector.broadcast %54 : vector<1x32xf32> to vector<8x32xf32>
    %149 = arith.mulf %85, %148 : vector<8x32xf32>
    %150 = arith.truncf %149 : vector<8x32xf32> to vector<8x32xbf16>
    %cst_65 = arith.constant dense<0.000000e+00> : vector<8x8xf32>
    %151 = tpu.matmul %150, %87, %cst_65 {dimension_numbers = #tpu.dot_dimension_numbers<[1], [1], [0], [0], [0, 0, 1, 0], [], []>} : vector<8x32xbf16>, vector<8x32xbf16>, vector<8x8xf32> -> vector<8x8xf32>
    %cst_66 = arith.constant dense<0xFF800000> : vector<8xf32>
    %152 = vector.multi_reduction <maximumf>, %151, %cst_66 [1] : vector<8x8xf32> to vector<8xf32>
    %153 = vector.shape_cast %152 : vector<8xf32> to vector<8x1xf32>
    %154 = vector.broadcast %153 : vector<8x1xf32> to vector<8x8xf32>
    %155 = arith.subf %151, %154 : vector<8x8xf32>
    %156 = math.exp %155 : vector<8x8xf32>
    %cst_67 = arith.constant dense<0.000000e+00> : vector<8xf32>
    %157 = vector.multi_reduction <add>, %156, %cst_67 [1] : vector<8x8xf32> to vector<8xf32>
    %158 = vector.shape_cast %157 : vector<8xf32> to vector<8x1xf32>
    %159 = tpu.reciprocal %158 {approx = true} : vector<8x1xf32> -> vector<8x1xf32>
    %160 = vector.broadcast %159 : vector<8x1xf32> to vector<8x8xf32>
    %161 = arith.mulf %156, %160 : vector<8x8xf32>
    %162 = vector.broadcast %54 : vector<1x32xf32> to vector<8x32xf32>
    %163 = arith.mulf %88, %162 : vector<8x32xf32>
    %164 = arith.truncf %163 : vector<8x32xf32> to vector<8x32xbf16>
    %165 = arith.truncf %161 : vector<8x8xf32> to vector<8x8xbf16>
    %cst_68 = arith.constant dense<0.000000e+00> : vector<8x32xf32>
    %166 = tpu.matmul %165, %164, %cst_68 {dimension_numbers = #tpu.dot_dimension_numbers<[1], [0], [0], [1], [0, 0, 1, 1], [], []>} : vector<8x8xbf16>, vector<8x32xbf16>, vector<8x32xf32> -> vector<8x32xf32>
    %167 = arith.addf %147, %166 : vector<8x32xf32>
    %168 = arith.truncf %167 : vector<8x32xf32> to vector<8x32xbf16>
    %cst_69 = arith.constant dense<0.000000e+00> : vector<8x32xf32>
    %169 = tpu.matmul %168, %58, %cst_69 {dimension_numbers = #tpu.dot_dimension_numbers<[1], [0], [0], [1], [0, 0, 1, 1], [], []>} : vector<8x32xbf16>, vector<32x32xbf16>, vector<8x32xf32> -> vector<8x32xf32>
    %170 = arith.addf %25, %169 : vector<8x32xf32>
    %171 = vector.broadcast %66 : vector<1x32xf32> to vector<8x32xf32>
    %172 = arith.addf %170, %171 : vector<8x32xf32>
    %cst_70 = arith.constant dense<0.000000e+00> : vector<8xf32>
    %173 = vector.multi_reduction <add>, %172, %cst_70 [1] : vector<8x32xf32> to vector<8xf32>
    %174 = vector.shape_cast %173 : vector<8xf32> to vector<8x1xf32>
    %cst_71 = arith.constant 3.200000e+01 : f32
    %175 = vector.broadcast %cst_71 : f32 to vector<8x1xf32>
    %176 = arith.divf %174, %175 : vector<8x1xf32>
    %177 = vector.broadcast %176 : vector<8x1xf32> to vector<8x32xf32>
    %178 = arith.subf %172, %177 : vector<8x32xf32>
    %179 = arith.mulf %178, %178 : vector<8x32xf32>
    %cst_72 = arith.constant dense<0.000000e+00> : vector<8xf32>
    %180 = vector.multi_reduction <add>, %179, %cst_72 [1] : vector<8x32xf32> to vector<8xf32>
    %181 = vector.shape_cast %180 : vector<8xf32> to vector<8x1xf32>
    %cst_73 = arith.constant 3.200000e+01 : f32
    %182 = vector.broadcast %cst_73 : f32 to vector<8x1xf32>
    %183 = arith.divf %181, %182 : vector<8x1xf32>
    %184 = vector.broadcast %176 : vector<8x1xf32> to vector<8x32xf32>
    %185 = arith.subf %172, %184 : vector<8x32xf32>
    %cst_74 = arith.constant 9.99999974E-6 : f32
    %186 = vector.broadcast %cst_74 : f32 to vector<8x1xf32>
    %187 = arith.addf %183, %186 : vector<8x1xf32>
    %188 = math.rsqrt %187 : vector<8x1xf32>
    %189 = vector.broadcast %188 : vector<8x1xf32> to vector<8x32xf32>
    %190 = arith.mulf %185, %189 : vector<8x32xf32>
    %191 = vector.broadcast %68 : vector<1x32xf32> to vector<8x32xf32>
    %192 = arith.mulf %190, %191 : vector<8x32xf32>
    %193 = vector.broadcast %70 : vector<1x32xf32> to vector<8x32xf32>
    %194 = arith.addf %192, %193 : vector<8x32xf32>
    %195 = arith.truncf %194 : vector<8x32xf32> to vector<8x32xbf16>
    %cst_75 = arith.constant dense<0.000000e+00> : vector<8x64xf32>
    %196 = tpu.matmul %195, %60, %cst_75 {dimension_numbers = #tpu.dot_dimension_numbers<[1], [0], [0], [1], [0, 0, 1, 1], [], []>} : vector<8x32xbf16>, vector<32x64xbf16>, vector<8x64xf32> -> vector<8x64xf32>
    %197 = vector.broadcast %72 : vector<1x64xf32> to vector<8x64xf32>
    %198 = arith.addf %196, %197 : vector<8x64xf32>
    %cst_76 = arith.constant 0.000000e+00 : f32
    %199 = vector.broadcast %cst_76 : f32 to vector<8x64xf32>
    %200 = arith.maximumf %198, %199 : vector<8x64xf32>
    %201 = arith.truncf %200 : vector<8x64xf32> to vector<8x64xbf16>
    %cst_77 = arith.constant dense<0.000000e+00> : vector<8x32xf32>
    %202 = tpu.matmul %201, %62, %cst_77 {dimension_numbers = #tpu.dot_dimension_numbers<[1], [0], [0], [1], [0, 0, 1, 1], [], []>} : vector<8x64xbf16>, vector<64x32xbf16>, vector<8x32xf32> -> vector<8x32xf32>
    %203 = arith.addf %194, %202 : vector<8x32xf32>
    %204 = vector.broadcast %74 : vector<1x32xf32> to vector<8x32xf32>
    %205 = arith.addf %203, %204 : vector<8x32xf32>
    %cst_78 = arith.constant dense<0.000000e+00> : vector<8xf32>
    %206 = vector.multi_reduction <add>, %205, %cst_78 [1] : vector<8x32xf32> to vector<8xf32>
    %207 = vector.shape_cast %206 : vector<8xf32> to vector<8x1xf32>
    %cst_79 = arith.constant 3.200000e+01 : f32
    %208 = vector.broadcast %cst_79 : f32 to vector<8x1xf32>
    %209 = arith.divf %207, %208 : vector<8x1xf32>
    %210 = vector.broadcast %209 : vector<8x1xf32> to vector<8x32xf32>
    %211 = arith.subf %205, %210 : vector<8x32xf32>
    %212 = arith.mulf %211, %211 : vector<8x32xf32>
    %cst_80 = arith.constant dense<0.000000e+00> : vector<8xf32>
    %213 = vector.multi_reduction <add>, %212, %cst_80 [1] : vector<8x32xf32> to vector<8xf32>
    %214 = vector.shape_cast %213 : vector<8xf32> to vector<8x1xf32>
    %cst_81 = arith.constant 3.200000e+01 : f32
    %215 = vector.broadcast %cst_81 : f32 to vector<8x1xf32>
    %216 = arith.divf %214, %215 : vector<8x1xf32>
    %217 = vector.broadcast %209 : vector<8x1xf32> to vector<8x32xf32>
    %218 = arith.subf %205, %217 : vector<8x32xf32>
    %cst_82 = arith.constant 9.99999974E-6 : f32
    %219 = vector.broadcast %cst_82 : f32 to vector<8x1xf32>
    %220 = arith.addf %216, %219 : vector<8x1xf32>
    %221 = math.rsqrt %220 : vector<8x1xf32>
    %222 = vector.broadcast %221 : vector<8x1xf32> to vector<8x32xf32>
    %223 = arith.mulf %218, %222 : vector<8x32xf32>
    %224 = vector.broadcast %76 : vector<1x32xf32> to vector<8x32xf32>
    %225 = arith.mulf %223, %224 : vector<8x32xf32>
    %226 = vector.broadcast %78 : vector<1x32xf32> to vector<8x32xf32>
    %227 = arith.addf %225, %226 : vector<8x32xf32>
    %c1_83 = arith.constant 1 : index
    %c0_84 = arith.constant 0 : index
    %c0_85 = arith.constant 0 : index
    %228 = vector.load %arg5[%c1_83, %c0_84, %c0_85] : memref<2x32x192xbf16, #tpu.memory_space<vmem>>, vector<1x32x96xbf16>
    %229 = vector.shape_cast %228 : vector<1x32x96xbf16> to vector<32x96xbf16>
    %c1_86 = arith.constant 1 : index
    %c0_87 = arith.constant 0 : index
    %c96_88 = arith.constant 96 : index
    %230 = vector.load %arg5[%c1_86, %c0_87, %c96_88] : memref<2x32x192xbf16, #tpu.memory_space<vmem>>, vector<1x32x32xbf16>
    %231 = vector.shape_cast %230 : vector<1x32x32xbf16> to vector<32x32xbf16>
    %c1_89 = arith.constant 1 : index
    %c0_90 = arith.constant 0 : index
    %c128_91 = arith.constant 128 : index
    %232 = vector.load %arg5[%c1_89, %c0_90, %c128_91] : memref<2x32x192xbf16, #tpu.memory_space<vmem>>, vector<1x32x64xbf16>
    %233 = vector.shape_cast %232 : vector<1x32x64xbf16> to vector<32x64xbf16>
    %c1_92 = arith.constant 1 : index
    %c0_93 = arith.constant 0 : index
    %c0_94 = arith.constant 0 : index
    %234 = vector.load %arg6[%c1_92, %c0_93, %c0_94] : memref<2x64x32xbf16, #tpu.memory_space<vmem>>, vector<1x64x32xbf16>
    %235 = vector.shape_cast %234 : vector<1x64x32xbf16> to vector<64x32xbf16>
    %c1_95 = arith.constant 1 : index
    %c0_96 = arith.constant 0 : index
    %c0_97 = arith.constant 0 : index
    %236 = vector.load %arg7[%c1_95, %c0_96, %c0_97] : memref<2x8x96xf32, #tpu.memory_space<vmem>>, vector<1x1x96xf32>
    %237 = vector.shape_cast %236 : vector<1x1x96xf32> to vector<1x96xf32>
    %c1_98 = arith.constant 1 : index
    %c1_99 = arith.constant 1 : index
    %c0_100 = arith.constant 0 : index
    %238 = vector.load %arg7[%c1_98, %c1_99, %c0_100] : memref<2x8x96xf32, #tpu.memory_space<vmem>>, vector<1x1x32xf32>
    %239 = vector.shape_cast %238 : vector<1x1x32xf32> to vector<1x32xf32>
    %c1_101 = arith.constant 1 : index
    %c2_102 = arith.constant 2 : index
    %c0_103 = arith.constant 0 : index
    %240 = vector.load %arg7[%c1_101, %c2_102, %c0_103] : memref<2x8x96xf32, #tpu.memory_space<vmem>>, vector<1x1x32xf32>
    %241 = vector.shape_cast %240 : vector<1x1x32xf32> to vector<1x32xf32>
    %c1_104 = arith.constant 1 : index
    %c3_105 = arith.constant 3 : index
    %c0_106 = arith.constant 0 : index
    %242 = vector.load %arg7[%c1_104, %c3_105, %c0_106] : memref<2x8x96xf32, #tpu.memory_space<vmem>>, vector<1x1x32xf32>
    %243 = vector.shape_cast %242 : vector<1x1x32xf32> to vector<1x32xf32>
    %c1_107 = arith.constant 1 : index
    %c4_108 = arith.constant 4 : index
    %c0_109 = arith.constant 0 : index
    %244 = vector.load %arg7[%c1_107, %c4_108, %c0_109] : memref<2x8x96xf32, #tpu.memory_space<vmem>>, vector<1x1x64xf32>
    %245 = vector.shape_cast %244 : vector<1x1x64xf32> to vector<1x64xf32>
    %c1_110 = arith.constant 1 : index
    %c5_111 = arith.constant 5 : index
    %c0_112 = arith.constant 0 : index
    %246 = vector.load %arg7[%c1_110, %c5_111, %c0_112] : memref<2x8x96xf32, #tpu.memory_space<vmem>>, vector<1x1x32xf32>
    %247 = vector.shape_cast %246 : vector<1x1x32xf32> to vector<1x32xf32>
    %c1_113 = arith.constant 1 : index
    %c6_114 = arith.constant 6 : index
    %c0_115 = arith.constant 0 : index
    %248 = vector.load %arg7[%c1_113, %c6_114, %c0_115] : memref<2x8x96xf32, #tpu.memory_space<vmem>>, vector<1x1x32xf32>
    %249 = vector.shape_cast %248 : vector<1x1x32xf32> to vector<1x32xf32>
    %c1_116 = arith.constant 1 : index
    %c7_117 = arith.constant 7 : index
    %c0_118 = arith.constant 0 : index
    %250 = vector.load %arg7[%c1_116, %c7_117, %c0_118] : memref<2x8x96xf32, #tpu.memory_space<vmem>>, vector<1x1x32xf32>
    %251 = vector.shape_cast %250 : vector<1x1x32xf32> to vector<1x32xf32>
    %252 = arith.truncf %227 : vector<8x32xf32> to vector<8x32xbf16>
    %cst_119 = arith.constant dense<0.000000e+00> : vector<8x96xf32>
    %253 = tpu.matmul %252, %229, %cst_119 {dimension_numbers = #tpu.dot_dimension_numbers<[1], [0], [0], [1], [0, 0, 1, 1], [], []>} : vector<8x32xbf16>, vector<32x96xbf16>, vector<8x96xf32> -> vector<8x96xf32>
    %254 = vector.broadcast %237 : vector<1x96xf32> to vector<8x96xf32>
    %255 = arith.addf %253, %254 : vector<8x96xf32>
    %256 = vector.extract_strided_slice %255 {offsets = [0, 0], sizes = [8, 32], strides = [1, 1]} : vector<8x96xf32> to vector<8x32xf32>
    %cst_120 = arith.constant 0.353553385 : f32
    %257 = vector.broadcast %cst_120 : f32 to vector<8x32xf32>
    %258 = arith.mulf %256, %257 : vector<8x32xf32>
    %259 = vector.extract_strided_slice %255 {offsets = [0, 32], sizes = [8, 32], strides = [1, 1]} : vector<8x96xf32> to vector<8x32xf32>
    %260 = arith.truncf %259 : vector<8x32xf32> to vector<8x32xbf16>
    %261 = vector.extract_strided_slice %255 {offsets = [0, 64], sizes = [8, 32], strides = [1, 1]} : vector<8x96xf32> to vector<8x32xf32>
    %262 = vector.broadcast %33 : vector<1x32xf32> to vector<8x32xf32>
    %263 = arith.mulf %258, %262 : vector<8x32xf32>
    %264 = arith.truncf %263 : vector<8x32xf32> to vector<8x32xbf16>
    %cst_121 = arith.constant dense<0.000000e+00> : vector<8x8xf32>
    %265 = tpu.matmul %264, %260, %cst_121 {dimension_numbers = #tpu.dot_dimension_numbers<[1], [1], [0], [0], [0, 0, 1, 0], [], []>} : vector<8x32xbf16>, vector<8x32xbf16>, vector<8x8xf32> -> vector<8x8xf32>
    %cst_122 = arith.constant dense<0xFF800000> : vector<8xf32>
    %266 = vector.multi_reduction <maximumf>, %265, %cst_122 [1] : vector<8x8xf32> to vector<8xf32>
    %267 = vector.shape_cast %266 : vector<8xf32> to vector<8x1xf32>
    %268 = vector.broadcast %267 : vector<8x1xf32> to vector<8x8xf32>
    %269 = arith.subf %265, %268 : vector<8x8xf32>
    %270 = math.exp %269 : vector<8x8xf32>
    %cst_123 = arith.constant dense<0.000000e+00> : vector<8xf32>
    %271 = vector.multi_reduction <add>, %270, %cst_123 [1] : vector<8x8xf32> to vector<8xf32>
    %272 = vector.shape_cast %271 : vector<8xf32> to vector<8x1xf32>
    %273 = tpu.reciprocal %272 {approx = true} : vector<8x1xf32> -> vector<8x1xf32>
    %274 = vector.broadcast %273 : vector<8x1xf32> to vector<8x8xf32>
    %275 = arith.mulf %270, %274 : vector<8x8xf32>
    %276 = vector.broadcast %33 : vector<1x32xf32> to vector<8x32xf32>
    %277 = arith.mulf %261, %276 : vector<8x32xf32>
    %278 = arith.truncf %277 : vector<8x32xf32> to vector<8x32xbf16>
    %279 = arith.truncf %275 : vector<8x8xf32> to vector<8x8xbf16>
    %cst_124 = arith.constant dense<0.000000e+00> : vector<8x32xf32>
    %280 = tpu.matmul %279, %278, %cst_124 {dimension_numbers = #tpu.dot_dimension_numbers<[1], [0], [0], [1], [0, 0, 1, 1], [], []>} : vector<8x8xbf16>, vector<8x32xbf16>, vector<8x32xf32> -> vector<8x32xf32>
    %281 = vector.broadcast %40 : vector<1x32xf32> to vector<8x32xf32>
    %282 = arith.mulf %258, %281 : vector<8x32xf32>
    %283 = arith.truncf %282 : vector<8x32xf32> to vector<8x32xbf16>
    %cst_125 = arith.constant dense<0.000000e+00> : vector<8x8xf32>
    %284 = tpu.matmul %283, %260, %cst_125 {dimension_numbers = #tpu.dot_dimension_numbers<[1], [1], [0], [0], [0, 0, 1, 0], [], []>} : vector<8x32xbf16>, vector<8x32xbf16>, vector<8x8xf32> -> vector<8x8xf32>
    %cst_126 = arith.constant dense<0xFF800000> : vector<8xf32>
    %285 = vector.multi_reduction <maximumf>, %284, %cst_126 [1] : vector<8x8xf32> to vector<8xf32>
    %286 = vector.shape_cast %285 : vector<8xf32> to vector<8x1xf32>
    %287 = vector.broadcast %286 : vector<8x1xf32> to vector<8x8xf32>
    %288 = arith.subf %284, %287 : vector<8x8xf32>
    %289 = math.exp %288 : vector<8x8xf32>
    %cst_127 = arith.constant dense<0.000000e+00> : vector<8xf32>
    %290 = vector.multi_reduction <add>, %289, %cst_127 [1] : vector<8x8xf32> to vector<8xf32>
    %291 = vector.shape_cast %290 : vector<8xf32> to vector<8x1xf32>
    %292 = tpu.reciprocal %291 {approx = true} : vector<8x1xf32> -> vector<8x1xf32>
    %293 = vector.broadcast %292 : vector<8x1xf32> to vector<8x8xf32>
    %294 = arith.mulf %289, %293 : vector<8x8xf32>
    %295 = vector.broadcast %40 : vector<1x32xf32> to vector<8x32xf32>
    %296 = arith.mulf %261, %295 : vector<8x32xf32>
    %297 = arith.truncf %296 : vector<8x32xf32> to vector<8x32xbf16>
    %298 = arith.truncf %294 : vector<8x8xf32> to vector<8x8xbf16>
    %cst_128 = arith.constant dense<0.000000e+00> : vector<8x32xf32>
    %299 = tpu.matmul %298, %297, %cst_128 {dimension_numbers = #tpu.dot_dimension_numbers<[1], [0], [0], [1], [0, 0, 1, 1], [], []>} : vector<8x8xbf16>, vector<8x32xbf16>, vector<8x32xf32> -> vector<8x32xf32>
    %300 = arith.addf %280, %299 : vector<8x32xf32>
    %301 = vector.broadcast %47 : vector<1x32xf32> to vector<8x32xf32>
    %302 = arith.mulf %258, %301 : vector<8x32xf32>
    %303 = arith.truncf %302 : vector<8x32xf32> to vector<8x32xbf16>
    %cst_129 = arith.constant dense<0.000000e+00> : vector<8x8xf32>
    %304 = tpu.matmul %303, %260, %cst_129 {dimension_numbers = #tpu.dot_dimension_numbers<[1], [1], [0], [0], [0, 0, 1, 0], [], []>} : vector<8x32xbf16>, vector<8x32xbf16>, vector<8x8xf32> -> vector<8x8xf32>
    %cst_130 = arith.constant dense<0xFF800000> : vector<8xf32>
    %305 = vector.multi_reduction <maximumf>, %304, %cst_130 [1] : vector<8x8xf32> to vector<8xf32>
    %306 = vector.shape_cast %305 : vector<8xf32> to vector<8x1xf32>
    %307 = vector.broadcast %306 : vector<8x1xf32> to vector<8x8xf32>
    %308 = arith.subf %304, %307 : vector<8x8xf32>
    %309 = math.exp %308 : vector<8x8xf32>
    %cst_131 = arith.constant dense<0.000000e+00> : vector<8xf32>
    %310 = vector.multi_reduction <add>, %309, %cst_131 [1] : vector<8x8xf32> to vector<8xf32>
    %311 = vector.shape_cast %310 : vector<8xf32> to vector<8x1xf32>
    %312 = tpu.reciprocal %311 {approx = true} : vector<8x1xf32> -> vector<8x1xf32>
    %313 = vector.broadcast %312 : vector<8x1xf32> to vector<8x8xf32>
    %314 = arith.mulf %309, %313 : vector<8x8xf32>
    %315 = vector.broadcast %47 : vector<1x32xf32> to vector<8x32xf32>
    %316 = arith.mulf %261, %315 : vector<8x32xf32>
    %317 = arith.truncf %316 : vector<8x32xf32> to vector<8x32xbf16>
    %318 = arith.truncf %314 : vector<8x8xf32> to vector<8x8xbf16>
    %cst_132 = arith.constant dense<0.000000e+00> : vector<8x32xf32>
    %319 = tpu.matmul %318, %317, %cst_132 {dimension_numbers = #tpu.dot_dimension_numbers<[1], [0], [0], [1], [0, 0, 1, 1], [], []>} : vector<8x8xbf16>, vector<8x32xbf16>, vector<8x32xf32> -> vector<8x32xf32>
    %320 = arith.addf %300, %319 : vector<8x32xf32>
    %321 = vector.broadcast %54 : vector<1x32xf32> to vector<8x32xf32>
    %322 = arith.mulf %258, %321 : vector<8x32xf32>
    %323 = arith.truncf %322 : vector<8x32xf32> to vector<8x32xbf16>
    %cst_133 = arith.constant dense<0.000000e+00> : vector<8x8xf32>
    %324 = tpu.matmul %323, %260, %cst_133 {dimension_numbers = #tpu.dot_dimension_numbers<[1], [1], [0], [0], [0, 0, 1, 0], [], []>} : vector<8x32xbf16>, vector<8x32xbf16>, vector<8x8xf32> -> vector<8x8xf32>
    %cst_134 = arith.constant dense<0xFF800000> : vector<8xf32>
    %325 = vector.multi_reduction <maximumf>, %324, %cst_134 [1] : vector<8x8xf32> to vector<8xf32>
    %326 = vector.shape_cast %325 : vector<8xf32> to vector<8x1xf32>
    %327 = vector.broadcast %326 : vector<8x1xf32> to vector<8x8xf32>
    %328 = arith.subf %324, %327 : vector<8x8xf32>
    %329 = math.exp %328 : vector<8x8xf32>
    %cst_135 = arith.constant dense<0.000000e+00> : vector<8xf32>
    %330 = vector.multi_reduction <add>, %329, %cst_135 [1] : vector<8x8xf32> to vector<8xf32>
    %331 = vector.shape_cast %330 : vector<8xf32> to vector<8x1xf32>
    %332 = tpu.reciprocal %331 {approx = true} : vector<8x1xf32> -> vector<8x1xf32>
    %333 = vector.broadcast %332 : vector<8x1xf32> to vector<8x8xf32>
    %334 = arith.mulf %329, %333 : vector<8x8xf32>
    %335 = vector.broadcast %54 : vector<1x32xf32> to vector<8x32xf32>
    %336 = arith.mulf %261, %335 : vector<8x32xf32>
    %337 = arith.truncf %336 : vector<8x32xf32> to vector<8x32xbf16>
    %338 = arith.truncf %334 : vector<8x8xf32> to vector<8x8xbf16>
    %cst_136 = arith.constant dense<0.000000e+00> : vector<8x32xf32>
    %339 = tpu.matmul %338, %337, %cst_136 {dimension_numbers = #tpu.dot_dimension_numbers<[1], [0], [0], [1], [0, 0, 1, 1], [], []>} : vector<8x8xbf16>, vector<8x32xbf16>, vector<8x32xf32> -> vector<8x32xf32>
    %340 = arith.addf %320, %339 : vector<8x32xf32>
    %341 = arith.truncf %340 : vector<8x32xf32> to vector<8x32xbf16>
    %cst_137 = arith.constant dense<0.000000e+00> : vector<8x32xf32>
    %342 = tpu.matmul %341, %231, %cst_137 {dimension_numbers = #tpu.dot_dimension_numbers<[1], [0], [0], [1], [0, 0, 1, 1], [], []>} : vector<8x32xbf16>, vector<32x32xbf16>, vector<8x32xf32> -> vector<8x32xf32>
    %343 = arith.addf %227, %342 : vector<8x32xf32>
    %344 = vector.broadcast %239 : vector<1x32xf32> to vector<8x32xf32>
    %345 = arith.addf %343, %344 : vector<8x32xf32>
    %cst_138 = arith.constant dense<0.000000e+00> : vector<8xf32>
    %346 = vector.multi_reduction <add>, %345, %cst_138 [1] : vector<8x32xf32> to vector<8xf32>
    %347 = vector.shape_cast %346 : vector<8xf32> to vector<8x1xf32>
    %cst_139 = arith.constant 3.200000e+01 : f32
    %348 = vector.broadcast %cst_139 : f32 to vector<8x1xf32>
    %349 = arith.divf %347, %348 : vector<8x1xf32>
    %350 = vector.broadcast %349 : vector<8x1xf32> to vector<8x32xf32>
    %351 = arith.subf %345, %350 : vector<8x32xf32>
    %352 = arith.mulf %351, %351 : vector<8x32xf32>
    %cst_140 = arith.constant dense<0.000000e+00> : vector<8xf32>
    %353 = vector.multi_reduction <add>, %352, %cst_140 [1] : vector<8x32xf32> to vector<8xf32>
    %354 = vector.shape_cast %353 : vector<8xf32> to vector<8x1xf32>
    %cst_141 = arith.constant 3.200000e+01 : f32
    %355 = vector.broadcast %cst_141 : f32 to vector<8x1xf32>
    %356 = arith.divf %354, %355 : vector<8x1xf32>
    %357 = vector.broadcast %349 : vector<8x1xf32> to vector<8x32xf32>
    %358 = arith.subf %345, %357 : vector<8x32xf32>
    %cst_142 = arith.constant 9.99999974E-6 : f32
    %359 = vector.broadcast %cst_142 : f32 to vector<8x1xf32>
    %360 = arith.addf %356, %359 : vector<8x1xf32>
    %361 = math.rsqrt %360 : vector<8x1xf32>
    %362 = vector.broadcast %361 : vector<8x1xf32> to vector<8x32xf32>
    %363 = arith.mulf %358, %362 : vector<8x32xf32>
    %364 = vector.broadcast %241 : vector<1x32xf32> to vector<8x32xf32>
    %365 = arith.mulf %363, %364 : vector<8x32xf32>
    %366 = vector.broadcast %243 : vector<1x32xf32> to vector<8x32xf32>
    %367 = arith.addf %365, %366 : vector<8x32xf32>
    %368 = arith.truncf %367 : vector<8x32xf32> to vector<8x32xbf16>
    %cst_143 = arith.constant dense<0.000000e+00> : vector<8x64xf32>
    %369 = tpu.matmul %368, %233, %cst_143 {dimension_numbers = #tpu.dot_dimension_numbers<[1], [0], [0], [1], [0, 0, 1, 1], [], []>} : vector<8x32xbf16>, vector<32x64xbf16>, vector<8x64xf32> -> vector<8x64xf32>
    %370 = vector.broadcast %245 : vector<1x64xf32> to vector<8x64xf32>
    %371 = arith.addf %369, %370 : vector<8x64xf32>
    %cst_144 = arith.constant 0.000000e+00 : f32
    %372 = vector.broadcast %cst_144 : f32 to vector<8x64xf32>
    %373 = arith.maximumf %371, %372 : vector<8x64xf32>
    %374 = arith.truncf %373 : vector<8x64xf32> to vector<8x64xbf16>
    %cst_145 = arith.constant dense<0.000000e+00> : vector<8x32xf32>
    %375 = tpu.matmul %374, %235, %cst_145 {dimension_numbers = #tpu.dot_dimension_numbers<[1], [0], [0], [1], [0, 0, 1, 1], [], []>} : vector<8x64xbf16>, vector<64x32xbf16>, vector<8x32xf32> -> vector<8x32xf32>
    %376 = arith.addf %367, %375 : vector<8x32xf32>
    %377 = vector.broadcast %247 : vector<1x32xf32> to vector<8x32xf32>
    %378 = arith.addf %376, %377 : vector<8x32xf32>
    %cst_146 = arith.constant dense<0.000000e+00> : vector<8xf32>
    %379 = vector.multi_reduction <add>, %378, %cst_146 [1] : vector<8x32xf32> to vector<8xf32>
    %380 = vector.shape_cast %379 : vector<8xf32> to vector<8x1xf32>
    %cst_147 = arith.constant 3.200000e+01 : f32
    %381 = vector.broadcast %cst_147 : f32 to vector<8x1xf32>
    %382 = arith.divf %380, %381 : vector<8x1xf32>
    %383 = vector.broadcast %382 : vector<8x1xf32> to vector<8x32xf32>
    %384 = arith.subf %378, %383 : vector<8x32xf32>
    %385 = arith.mulf %384, %384 : vector<8x32xf32>
    %cst_148 = arith.constant dense<0.000000e+00> : vector<8xf32>
    %386 = vector.multi_reduction <add>, %385, %cst_148 [1] : vector<8x32xf32> to vector<8xf32>
    %387 = vector.shape_cast %386 : vector<8xf32> to vector<8x1xf32>
    %cst_149 = arith.constant 3.200000e+01 : f32
    %388 = vector.broadcast %cst_149 : f32 to vector<8x1xf32>
    %389 = arith.divf %387, %388 : vector<8x1xf32>
    %390 = vector.broadcast %382 : vector<8x1xf32> to vector<8x32xf32>
    %391 = arith.subf %378, %390 : vector<8x32xf32>
    %cst_150 = arith.constant 9.99999974E-6 : f32
    %392 = vector.broadcast %cst_150 : f32 to vector<8x1xf32>
    %393 = arith.addf %389, %392 : vector<8x1xf32>
    %394 = math.rsqrt %393 : vector<8x1xf32>
    %395 = vector.broadcast %394 : vector<8x1xf32> to vector<8x32xf32>
    %396 = arith.mulf %391, %395 : vector<8x32xf32>
    %397 = vector.broadcast %249 : vector<1x32xf32> to vector<8x32xf32>
    %398 = arith.mulf %396, %397 : vector<8x32xf32>
    %399 = vector.broadcast %251 : vector<1x32xf32> to vector<8x32xf32>
    %400 = arith.addf %398, %399 : vector<8x32xf32>
    %401 = vector.extract_strided_slice %400 {offsets = [7, 0], sizes = [1, 32], strides = [1, 1]} : vector<8x32xf32> to vector<1x32xf32>
    %c3_151 = arith.constant 3 : index
    %c0_152 = arith.constant 0 : index
    %c0_153 = arith.constant 0 : index
    %402 = vector.load %arg3[%c3_151, %c0_152, %c0_153] : memref<4x32x32xbf16, #tpu.memory_space<vmem>>, vector<1x32x32xbf16>
    %403 = vector.shape_cast %402 : vector<1x32x32xbf16> to vector<32x32xbf16>
    %404 = arith.truncf %401 : vector<1x32xf32> to vector<1x32xbf16>
    %cst_154 = arith.constant dense<0.000000e+00> : vector<1x32xf32>
    %405 = tpu.matmul %404, %403, %cst_154 {dimension_numbers = #tpu.dot_dimension_numbers<[1], [0], [0], [1], [0, 0, 1, 1], [], []>} : vector<1x32xbf16>, vector<32x32xbf16>, vector<1x32xf32> -> vector<1x32xf32>
    %c2_155 = arith.constant 2 : index
    %c0_156 = arith.constant 0 : index
    %406 = vector.load %arg4[%c2_155, %c0_156] : memref<8x32xf32, #tpu.memory_space<vmem>>, vector<1x32xf32>
    %407 = arith.addf %405, %406 : vector<1x32xf32>
    %c0_157 = arith.constant 0 : index
    %c0_158 = arith.constant 0 : index
    %c0_159 = arith.constant 0 : index
    %408 = vector.load %arg8[%c0_157, %c0_158, %c0_159] : memref<1x1x32xf32, #tpu.memory_space<vmem>>, vector<1x1x32xf32>
    %409 = vector.shape_cast %408 : vector<1x1x32xf32> to vector<1x32xf32>
    %410 = vector.shape_cast %407 : vector<1x32xf32> to vector<1x1x32xf32>
    tpu.vector_store %arg8[%c0_157, %c0_158, %c0_159], %410 {strides = array<i32>} : memref<1x1x32xf32, #tpu.memory_space<vmem>>, vector<1x1x32xf32>,
    return
  }
  func.func @transform_0(%arg0: i32) -> (i32, i32, i32) {
    %c0_i32 = arith.constant 0 : i32
    %c0_i32_0 = arith.constant 0 : i32
    %c0_i32_1 = arith.constant 0 : i32
    return %arg0, %c0_i32, %c0_i32_0 : i32, i32, i32
  }
  func.func @transform_1(%arg0: i32) -> (i32, i32, i32) {
    %c0_i32 = arith.constant 0 : i32
    %c0_i32_0 = arith.constant 0 : i32
    %c0_i32_1 = arith.constant 0 : i32
    return %arg0, %c0_i32, %c0_i32_0 : i32, i32, i32
  }
  func.func @transform_2(%arg0: i32) -> (i32, i32, i32) {
    %c0_i32 = arith.constant 0 : i32
    %c0_i32_0 = arith.constant 0 : i32
    %c0_i32_1 = arith.constant 0 : i32
    %c0_i32_2 = arith.constant 0 : i32
    return %c0_i32, %c0_i32_0, %c0_i32_1 : i32, i32, i32
  }
  func.func @transform_3(%arg0: i32) -> (i32, i32) {
    %c0_i32 = arith.constant 0 : i32
    %c0_i32_0 = arith.constant 0 : i32
    %c0_i32_1 = arith.constant 0 : i32
    return %c0_i32, %c0_i32_0 : i32, i32
  }
  func.func @transform_4(%arg0: i32) -> (i32, i32, i32) {
    %c0_i32 = arith.constant 0 : i32
    %c0_i32_0 = arith.constant 0 : i32
    %c0_i32_1 = arith.constant 0 : i32
    %c0_i32_2 = arith.constant 0 : i32
    return %c0_i32, %c0_i32_0, %c0_i32_1 : i32, i32, i32
  }
  func.func @transform_5(%arg0: i32) -> (i32, i32, i32) {
    %c0_i32 = arith.constant 0 : i32
    %c0_i32_0 = arith.constant 0 : i32
    %c0_i32_1 = arith.constant 0 : i32
    %c0_i32_2 = arith.constant 0 : i32
    return %c0_i32, %c0_i32_0, %c0_i32_1 : i32, i32, i32
  }
  func.func @transform_6(%arg0: i32) -> (i32, i32, i32) {
    %c0_i32 = arith.constant 0 : i32
    %c0_i32_0 = arith.constant 0 : i32
    %c0_i32_1 = arith.constant 0 : i32
    %c0_i32_2 = arith.constant 0 : i32
    return %c0_i32, %c0_i32_0, %c0_i32_1 : i32, i32, i32
  }
  func.func @transform_7(%arg0: i32) -> (i32, i32, i32) {
    %c0_i32 = arith.constant 0 : i32
    %c0_i32_0 = arith.constant 0 : i32
    %c0_i32_1 = arith.constant 0 : i32
    return %arg0, %c0_i32, %c0_i32_0 : i32, i32, i32
  }
}

</mosaic_0001>

<llo_original>
// kernel: tile.8
$region0: #{tile.8}
  #allocation0 [shape = 's32[1]{0}', space=sflag, size = 0x4, scoped, tag = 'scoped memory for tile.8']
  %s0 = inlined_call_operand.vmem [shape: f32[8], index: 0, kind: input, shape index: {}]
  %s1 = inlined_call_operand.vmem [shape: f32[4,8], index: 1, kind: output, shape index: {}]
  // Predicated region
  $region2: #{tile.8} parent=0 // pred_check
    _
  $region3: #{tile.8} parent=0 // pred_check_branch
    %3 = sbr.rel (0) target = $region5
  $region4: #{tile.8} parent=0 // pred_region
    _
  $region5: #{tile.8} parent=0 // pred_fallthru
    _
  %v4 = vld [vmem:[%s0] ss:$0 sm:$0xff]
  %5 = vst [vmem:[%s1] sm:$0xf] %v4

// kernel: squeeze.5
$region0: #{squeeze.5}
  %s0 = inlined_call_operand.vmem [shape: f32[2,16], index: 0, kind: input, shape index: {}]
  %s1 = inlined_call_operand.hbm [shape: f32[2,4,4], index: 1, kind: output, shape index: {}]
  $region1: #{squeeze.5} parent=0
    #allocation0 [shape = 'u8[4096]{0}', space=vmem, size = 0x1000, scoped, tag = 'operand span for operand 1']
    #allocation1 [shape = 's32[1]{0}', space=sflag, size = 0x4, scoped, tag = 'scoped memory for squeeze.5']
    #allocation2 [shape = 'u8[8192]{0}', space=vmem, size = 0x2000, scoped, tag = 'scoped mem for output reshape']
    #allocation3 [shape = 'u8[4096]{0}', space=vmem, size = 0x1000, scoped, tag = 'scoped mem for input reshape']
    %2 = vsyncpa [#allocation1], 0
    %s4 = sshllo.u32 0, 2
    %v5 = vld [vmem:[%s0] sm:%s4]
    %6 = vst [vmem:[#allocation3] sm:%s4] %v5
    %v7 = vld [vmem:[#allocation3] sm:$0x3]
    %vm8 = vcmask 31744
    %9 = vst.msk [vmem:[#allocation2] ss:$8 sm:$0x3] %vm8, %v7
    %v10 = vld [vmem:[#allocation3] sm:$0x3]
    %11 = vrot.lane.b32.xlu0 %v10, 124
    %v12 = vpop.permute.xlu0 %11
    %vm13 = vcmask 31744
    %s14 = scalar_lea.vmem [#allocation2], 1
    %15 = vst.msk [vmem:[%s14] ss:$8 sm:$0x3] %vm13, %v12
    %v16 = vld [vmem:[#allocation3] sm:$0x3]
    %17 = vrot.lane.b32.xlu0 %v16, 120
    %v18 = vpop.permute.xlu0 %17
    %vm19 = vcmask 31744
    %s20 = scalar_lea.vmem [#allocation2], 2
    %21 = vst.msk [vmem:[%s20] ss:$8 sm:$0x3] %vm19, %v18
    %v22 = vld [vmem:[#allocation3] sm:$0x3]
    %23 = vrot.lane.b32.xlu0 %v22, 116
    %v24 = vpop.permute.xlu0 %23
    %vm25 = vcmask 31744
    %s26 = scalar_lea.vmem [#allocation2], 3
    %27 = vst.msk [vmem:[%s26] ss:$8 sm:$0x3] %vm25, %v24
    %s29 = sshllo.u32 0, 4
    %v31 = vld [vmem:[#allocation2] sm:%s29]
    %s32 = sshllo.u32 0, 4
    %33 = vst [vmem:[#allocation0] sm:%s32] %v31
    %s34 = scalar_lea.vmem [#allocation2], 8
    %v35 = vld [vmem:[%s34] sm:%s29]
    %s36 = sshllo.u32 0, 4
    %s37 = scalar_lea.vmem [#allocation0], 4
    %38 = vst [vmem:[%s37] sm:%s36] %v35
    %s40 = ssub.s32 128, 128
    %41 = vsyncadd [#allocation1], %s40
    %s43 = sshll.u32 [#allocation0], 4
    %s44 = int_to_ptr.vmem [resolvable:$true] %s43
    %46 = dma.vmem_to_hbm [thread:$0]  %s44, 128, %s1, [#allocation1]
    %47 = dma.done [#allocation1], 128
    %48 = vsyncpa [#allocation1], 1

// kernel: _lambda_.1
$region0: #{_lambda_.1}
  #allocation0 [shape = 'u32[]', space=smem, size = 0x4, offset = 0x4, fixed_abs, tag = 'smem constant byte address 0x4 - core index']
  #allocation1 [shape = 'u32[144,128]{1,0:T(1,128)}', space=vmem, size = 0x12000, scoped, tag = 'internal scratch']
  %s0 = inlined_call_operand.vmem [shape: f32[2,8,32], index: 0, kind: input, shape index: {}]
  %s1 = inlined_call_operand.vmem [shape: f32[2,1,32], index: 1, kind: input, shape index: {}]
  %s2 = inlined_call_operand.vmem [shape: bf16[4,32,32], index: 2, kind: input, shape index: {}]
  %s3 = inlined_call_operand.vmem [shape: f32[8,32], index: 3, kind: input, shape index: {}]
  %s4 = inlined_call_operand.vmem [shape: bf16[2,32,192], index: 4, kind: input, shape index: {}]
  %s5 = inlined_call_operand.vmem [shape: bf16[2,64,32], index: 5, kind: input, shape index: {}]
  %s6 = inlined_call_operand.vmem [shape: f32[2,8,96], index: 6, kind: input, shape index: {}]
  %s7 = inlined_call_operand.vmem [shape: f32[2,1,32], index: 7, kind: output, shape index: {}]
  %s8 = sld [smem:[#allocation0]]
  $region61: #{_lambda_.1} parent=0
    _
  %s10 = ssub.s32 1, %s8
  %s11 = scalar_select 0, %s10, %s8
  loop: start=0, step=1, limit=4
  $region2: #{_lambda_.1} parent=0 // loop_pre_header
    _
  $region3: #{_lambda_.1} parent=0 // loop_header
    %s13 = sphi 0, %s17
    %p14 = scmp.ge.s32.totalorder %s13, 4
    %s23 = sphi 0, %s25
    %s26 = sphi 0, %s23
    %s27 = sphi 0, %s26
    %s43 = sphi 0, %s27
    %s49 = sphi 0, %s51
    %s52 = sphi 0, %s49
    %s53 = sphi 0, %s52
    %s69 = sphi 0, %s53
    %s73 = sphi 0, %s73
    %s75 = sphi 0, %s73
    %s76 = sphi 0, %s75
    %s90 = sphi 0, %s76
    %s94 = sphi 0, %s94
    %s96 = sphi 0, %s94
    %s97 = sphi 0, %s96
    %s111 = sphi 0, %s97
    %s115 = sphi 0, %s115
    %s117 = sphi 0, %s115
    %s118 = sphi 0, %s117
    %s132 = sphi 0, %s118
    %s136 = sphi 0, %s136
    %s138 = sphi 0, %s136
    %s139 = sphi 0, %s138
    %s153 = sphi 0, %s139
    %s157 = sphi 0, %s157
    %s159 = sphi 0, %s157
    %s160 = sphi 0, %s159
    %s174 = sphi 0, %s160
    %s180 = sphi 0, %s182
    %s183 = sphi 0, %s180
    %s184 = sphi 0, %s183
    %s200 = sphi 0, %s184
  $region4: #{_lambda_.1} parent=0 // loop_header_branch
    %16 = sbr.rel (%p14) target = $region8
  $region5: #{_lambda_.1} parent=0 // loop_body
    %s18 = ssub.s32 %s13, 1
    %s19 = ssub.s32 %s13, 2
    %s20 = sadd.s32 %s13, 1
    %s21 = ssub.s32 %s13, %s20
    %p22 = scmp.eq.s32.totalorder %s21, 0
    %s24 = sadd.s32 %s23, 1
    %s25 = scalar_select %p22, %s23, %s24
    %p28 = pneg %p22
    %p29 = scmp.eq.s32.totalorder %s13, 1
    %p30 = por %p28, %p29
    %p31 = scmp.ne.s32.totalorder %s23, %s26
    %p32 = scmp.eq.s32.totalorder %s13, 0
    %p33 = por %p31, %p32
    %p34 = scmp.ne.s32.totalorder %s23, %s26
    %p35 = scmp.eq.s32.totalorder %s18, 1
    %p36 = por %p34, %p35
    %p37 = scmp.ne.s32.totalorder %s26, %s27
    %p38 = scmp.eq.s32.totalorder %s18, 0
    %p39 = por %p37, %p38
    %p40 = scmp.ne.s32.totalorder %s26, %s27
    %p41 = scmp.eq.s32.totalorder %s19, 1
    %p42 = por %p40, %p41
    %p44 = scmp.ne.s32.totalorder %s27, %s43
    %p45 = scmp.eq.s32.totalorder %s19, 0
    %p46 = por %p44, %p45
    %s47 = ssub.s32 %s13, %s20
    %p48 = scmp.eq.s32.totalorder %s47, 0
    %s50 = sadd.s32 %s49, 1
    %s51 = scalar_select %p48, %s49, %s50
    %p54 = pneg %p48
    %p55 = scmp.eq.s32.totalorder %s13, 1
    %p56 = por %p54, %p55
    %p57 = scmp.ne.s32.totalorder %s49, %s52
    %p58 = scmp.eq.s32.totalorder %s13, 0
    %p59 = por %p57, %p58
    %p60 = scmp.ne.s32.totalorder %s49, %s52
    %p61 = scmp.eq.s32.totalorder %s18, 1
    %p62 = por %p60, %p61
    %p63 = scmp.ne.s32.totalorder %s52, %s53
    %p64 = scmp.eq.s32.totalorder %s18, 0
    %p65 = por %p63, %p64
    %p66 = scmp.ne.s32.totalorder %s52, %s53
    %p67 = scmp.eq.s32.totalorder %s19, 1
    %p68 = por %p66, %p67
    %p70 = scmp.ne.s32.totalorder %s53, %s69
    %p71 = scmp.eq.s32.totalorder %s19, 0
    %p72 = por %p70, %p71
    %s74 = sadd.s32 %s73, 1
    %p77 = scmp.eq.s32.totalorder %s13, 1
    %p78 = scmp.ne.s32.totalorder %s73, %s75
    %p79 = scmp.eq.s32.totalorder %s13, 0
    %p80 = por %p78, %p79
    %p81 = scmp.ne.s32.totalorder %s73, %s75
    %p82 = scmp.eq.s32.totalorder %s18, 1
    %p83 = por %p81, %p82
    %p84 = scmp.ne.s32.totalorder %s75, %s76
    %p85 = scmp.eq.s32.totalorder %s18, 0
    %p86 = por %p84, %p85
    %p87 = scmp.ne.s32.totalorder %s75, %s76
    %p88 = scmp.eq.s32.totalorder %s19, 1
    %p89 = por %p87, %p88
    %p91 = scmp.ne.s32.totalorder %s76, %s90
    %p92 = scmp.eq.s32.totalorder %s19, 0
    %p93 = por %p91, %p92
    %s95 = sadd.s32 %s94, 1
    %p98 = scmp.eq.s32.totalorder %s13, 1
    %p99 = scmp.ne.s32.totalorder %s94, %s96
    %p100 = scmp.eq.s32.totalorder %s13, 0
    %p101 = por %p99, %p100
    %p102 = scmp.ne.s32.totalorder %s94, %s96
    %p103 = scmp.eq.s32.totalorder %s18, 1
    %p104 = por %p102, %p103
    %p105 = scmp.ne.s32.totalorder %s96, %s97
    %p106 = scmp.eq.s32.totalorder %s18, 0
    %p107 = por %p105, %p106
    %p108 = scmp.ne.s32.totalorder %s96, %s97
    %p109 = scmp.eq.s32.totalorder %s19, 1
    %p110 = por %p108, %p109
    %p112 = scmp.ne.s32.totalorder %s97, %s111
    %p113 = scmp.eq.s32.totalorder %s19, 0
    %p114 = por %p112, %p113
    %s116 = sadd.s32 %s115, 1
    %p119 = scmp.eq.s32.totalorder %s13, 1
    %p120 = scmp.ne.s32.totalorder %s115, %s117
    %p121 = scmp.eq.s32.totalorder %s13, 0
    %p122 = por %p120, %p121
    %p123 = scmp.ne.s32.totalorder %s115, %s117
    %p124 = scmp.eq.s32.totalorder %s18, 1
    %p125 = por %p123, %p124
    %p126 = scmp.ne.s32.totalorder %s117, %s118
    %p127 = scmp.eq.s32.totalorder %s18, 0
    %p128 = por %p126, %p127
    %p129 = scmp.ne.s32.totalorder %s117, %s118
    %p130 = scmp.eq.s32.totalorder %s19, 1
    %p131 = por %p129, %p130
    %p133 = scmp.ne.s32.totalorder %s118, %s132
    %p134 = scmp.eq.s32.totalorder %s19, 0
    %p135 = por %p133, %p134
    %s137 = sadd.s32 %s136, 1
    %p140 = scmp.eq.s32.totalorder %s13, 1
    %p141 = scmp.ne.s32.totalorder %s136, %s138
    %p142 = scmp.eq.s32.totalorder %s13, 0
    %p143 = por %p141, %p142
    %p144 = scmp.ne.s32.totalorder %s136, %s138
    %p145 = scmp.eq.s32.totalorder %s18, 1
    %p146 = por %p144, %p145
    %p147 = scmp.ne.s32.totalorder %s138, %s139
    %p148 = scmp.eq.s32.totalorder %s18, 0
    %p149 = por %p147, %p148
    %p150 = scmp.ne.s32.totalorder %s138, %s139
    %p151 = scmp.eq.s32.totalorder %s19, 1
    %p152 = por %p150, %p151
    %p154 = scmp.ne.s32.totalorder %s139, %s153
    %p155 = scmp.eq.s32.totalorder %s19, 0
    %p156 = por %p154, %p155
    %s158 = sadd.s32 %s157, 1
    %p161 = scmp.eq.s32.totalorder %s13, 1
    %p162 = scmp.ne.s32.totalorder %s157, %s159
    %p163 = scmp.eq.s32.totalorder %s13, 0
    %p164 = por %p162, %p163
    %p165 = scmp.ne.s32.totalorder %s157, %s159
    %p166 = scmp.eq.s32.totalorder %s18, 1
    %p167 = por %p165, %p166
    %p168 = scmp.ne.s32.totalorder %s159, %s160
    %p169 = scmp.eq.s32.totalorder %s18, 0
    %p170 = por %p168, %p169
    %p171 = scmp.ne.s32.totalorder %s159, %s160
    %p172 = scmp.eq.s32.totalorder %s19, 1
    %p173 = por %p171, %p172
    %p175 = scmp.ne.s32.totalorder %s160, %s174
    %p176 = scmp.eq.s32.totalorder %s19, 0
    %p177 = por %p175, %p176
    %s178 = ssub.s32 %s13, %s20
    %p179 = scmp.eq.s32.totalorder %s178, 0
    %s181 = sadd.s32 %s180, 1
    %s182 = scalar_select %p179, %s180, %s181
    %p185 = pneg %p179
    %p186 = scmp.eq.s32.totalorder %s13, 1
    %p187 = por %p185, %p186
    %p188 = scmp.ne.s32.totalorder %s180, %s183
    %p189 = scmp.eq.s32.totalorder %s13, 0
    %p190 = por %p188, %p189
    %p191 = scmp.ne.s32.totalorder %s180, %s183
    %p192 = scmp.eq.s32.totalorder %s18, 1
    %p193 = por %p191, %p192
    %p194 = scmp.ne.s32.totalorder %s183, %s184
    %p195 = scmp.eq.s32.totalorder %s18, 0
    %p196 = por %p194, %p195
    %p197 = scmp.ne.s32.totalorder %s183, %s184
    %p198 = scmp.eq.s32.totalorder %s19, 1
    %p199 = por %p197, %p198
    %p201 = scmp.ne.s32.totalorder %s184, %s200
    %p202 = scmp.eq.s32.totalorder %s19, 0
    %p203 = por %p201, %p202
    %p204 = scmp.le.s32.totalorder 1, %s13
    %p205 = scmp.lt.s32.totalorder %s13, 3
    %p206 = pnand %p204, %p205
    %p207 = pneg %p206
    // Predicated region
    $region9: #{_lambda_.1} parent=5 // pred_check
      _
    $region10: #{_lambda_.1} parent=5 // pred_check_branch
      %209 = sbr.rel (%p206) target = $region12
    $region11: #{_lambda_.1} parent=5 // pred_region
      %s210 = ssub.s32 %s13, 1
      // Predicated region
      $region13: #{_lambda_.1} parent=11 // pred_check
        %p211 = pneg %p86
      $region14: #{_lambda_.1} parent=11 // pred_check_branch
        %213 = sbr.rel (%p211) target = $region16
      $region15: #{_lambda_.1} parent=11 // pred_region
        _
      $region16: #{_lambda_.1} parent=11 // pred_fallthru
        _
      // Predicated region
      $region17: #{_lambda_.1} parent=11 // pred_check
        %p214 = pneg %p107
      $region18: #{_lambda_.1} parent=11 // pred_check_branch
        %216 = sbr.rel (%p214) target = $region20
      $region19: #{_lambda_.1} parent=11 // pred_region
        _
      $region20: #{_lambda_.1} parent=11 // pred_fallthru
        _
      // Predicated region
      $region21: #{_lambda_.1} parent=11 // pred_check
        %p217 = pneg %p128
      $region22: #{_lambda_.1} parent=11 // pred_check_branch
        %219 = sbr.rel (%p217) target = $region24
      $region23: #{_lambda_.1} parent=11 // pred_region
        _
      $region24: #{_lambda_.1} parent=11 // pred_fallthru
        _
      // Predicated region
      $region25: #{_lambda_.1} parent=11 // pred_check
        %p220 = pneg %p149
      $region26: #{_lambda_.1} parent=11 // pred_check_branch
        %222 = sbr.rel (%p220) target = $region28
      $region27: #{_lambda_.1} parent=11 // pred_region
        _
      $region28: #{_lambda_.1} parent=11 // pred_fallthru
        _
      // Predicated region
      $region29: #{_lambda_.1} parent=11 // pred_check
        %p223 = pneg %p170
      $region30: #{_lambda_.1} parent=11 // pred_check_branch
        %225 = sbr.rel (%p223) target = $region32
      $region31: #{_lambda_.1} parent=11 // pred_region
        _
      $region32: #{_lambda_.1} parent=11 // pred_fallthru
        _
    $region12: #{_lambda_.1} parent=5 // pred_fallthru
      _
    %p226 = scmp.lt.s32.totalorder %s13, 2
    // Predicated region
    $region33: #{_lambda_.1} parent=5 // pred_check
      %p227 = pneg %p226
    $region34: #{_lambda_.1} parent=5 // pred_check_branch
      %229 = sbr.rel (%p227) target = $region36
    $region35: #{_lambda_.1} parent=5 // pred_region
      // Predicated region
      $region37: #{_lambda_.1} parent=35 // pred_check
        %p230 = pneg %p33
      $region38: #{_lambda_.1} parent=35 // pred_check_branch
        %232 = sbr.rel (%p230) target = $region40
      $region39: #{_lambda_.1} parent=35 // pred_region
        %p233 = scmp.lt.s32.totalorder %s13, 1
        %s234 = scalar_select %p233, %s13, 1
        %s235 = smul.addr %s234, 8
        %s236 = scalar_lea.vmem %s0, %s235
      $region40: #{_lambda_.1} parent=35 // pred_fallthru
        _
      // Predicated region
      $region41: #{_lambda_.1} parent=35 // pred_check
        %p237 = pneg %p59
      $region42: #{_lambda_.1} parent=35 // pred_check_branch
        %239 = sbr.rel (%p237) target = $region44
      $region43: #{_lambda_.1} parent=35 // pred_region
        %p240 = scmp.lt.s32.totalorder %s13, 1
        %s241 = scalar_select %p240, %s13, 1
        %s242 = scalar_lea.vmem %s1, %s241
      $region44: #{_lambda_.1} parent=35 // pred_fallthru
        _
    $region36: #{_lambda_.1} parent=5 // pred_fallthru
      _
    %p243 = scmp.le.s32.totalorder 1, %s13
    %p244 = scmp.lt.s32.totalorder %s13, 3
    %p245 = pnand %p243, %p244
    %p246 = pneg %p245
    // Predicated region
    $region45: #{_lambda_.1} parent=5 // pred_check
      _
    $region46: #{_lambda_.1} parent=5 // pred_check_branch
      %248 = sbr.rel (%p245) target = $region48
    $region47: #{_lambda_.1} parent=5 // pred_region
      %s249 = ssub.s32 %s13, 1
      %p250 = scmp.lt.s32.totalorder %s18, 1
      %s251 = scalar_select %p250, %s18, 1
      %s252 = smul.addr %s251, 8
      %s253 = scalar_lea.vmem %s0, %s252
      %p254 = pneg %p39
      %p255 = pneg %p36
      %p256 = scmp.lt.s32.totalorder %s18, 1
      %s257 = scalar_select %p256, %s18, 1
      %s258 = scalar_lea.vmem %s1, %s257
      %p259 = pneg %p65
      %p260 = pneg %p62
      %p261 = pneg %p86
      %p262 = pneg %p83
      %p263 = pneg %p107
      %p264 = pneg %p104
      %p265 = pneg %p128
      %p266 = pneg %p125
      %p267 = pneg %p149
      %p268 = pneg %p146
      %p269 = pneg %p170
      %p270 = pneg %p167
      %p271 = pneg %p196
      %p272 = pneg %p193
      %p273 = scmp.lt.s32.totalorder %s18, 1
      %s274 = scalar_select %p273, %s18, 1
      %s275 = scalar_lea.vmem %s7, %s274
      %p276 = scmp.lt.s32.totalorder %s18, 1
      %s277 = scalar_select %p276, %s18, 1
      %s278 = smul.addr %s277, 8
      %s279 = scalar_lea.vmem %s0, %s278
      %p280 = scmp.lt.s32.totalorder %s18, 1
      %s281 = scalar_select %p280, %s18, 1
      %s282 = scalar_lea.vmem %s1, %s281
      %p283 = scmp.lt.s32.totalorder %s18, 1
      %s284 = scalar_select %p283, %s18, 1
      %s285 = scalar_lea.vmem %s7, %s284
      %v287 = vld [vmem:[%s279] sm:$0xff]
      %v288 = vld [vmem:[%s282] sm:$0x1]
      %v289 = vld [vmem:[%s2] sm:$0xf]
      %v290 = vld [vmem:[%s2 + $0x4] sm:$0xf]
      %v291 = vld [vmem:[%s2 + $0x8] sm:$0xf]
      %v292 = vld [vmem:[%s2 + $0xc] sm:$0xf]
      %v293 = vpack.c.bf16 %v287, %v287
      %v294 = vld [vmem:[%s3] sm:$0x1]
      %v295 = vlaneseq
      %v296 = vshrl.u32 %v295, 7
      %v297 = vsub.s32 0, %v296
      %v298 = vrot.slane %v294, %v297
      %v303 = vunpack.c.l.b16 %v289
      %v304 = vunpack.c.l.b16 %v290
      %v305 = vunpack.c.l.b16 %v291
      %v306 = vunpack.c.l.b16 %v292
      %v307 = vpack.c.b16 %v304, %v303
      %v308 = vpack.c.b16 %v306, %v305
      %vm311 = vcmask 261120
      %v313 = vsel %vm311, %v293, 0
      %315 = vmatprep.subr.bf16.mxu0 0
      %316 = vmatpush1.bf16.msra.mxu0 %v307
      %317 = vmatprep.subr.bf16.mxu0 0
      %318 = vmatpush1.bf16.msra.mxu0 %v308
      %319 = vmatprep.subr.bf16.mxu0 0
      %320 = vmatpush1.bf16.msra.mxu0 0
      %321 = vmatprep.subr.bf16.mxu0 0
      %322 = vmatpush1.bf16.msra.mxu0 0
      %323 = vmatprep.subr.bf16.mxu0 0
      %324 = vmatpush1.bf16.msra.mxu0 0
      %325 = vmatprep.subr.bf16.mxu0 0
      %326 = vmatpush1.bf16.msra.mxu0 0
      %327 = vmatprep.subr.bf16.mxu0 0
      %328 = vmatpush1.bf16.msra.mxu0 0
      %329 = vmatprep.subr.bf16.mxu0 0
      %330 = vmatpush1.bf16.msra.mxu0 0
      %331 = vmatprep.subr.bf16.mxu0 0
      %332 = vmatpush1.bf16.msra.mxu0 0
      %333 = vmatprep.subr.bf16.mxu0 0
      %334 = vmatpush1.bf16.msra.mxu0 0
      %335 = vmatprep.subr.bf16.mxu0 0
      %336 = vmatpush1.bf16.msra.mxu0 0
      %337 = vmatprep.subr.bf16.mxu0 0
      %338 = vmatpush1.bf16.msra.mxu0 0
      %339 = vmatprep.subr.bf16.mxu0 0
      %340 = vmatpush1.bf16.msra.mxu0 0
      %341 = vmatprep.subr.bf16.mxu0 0
      %342 = vmatpush1.bf16.msra.mxu0 0
      %343 = vmatprep.subr.bf16.mxu0 0
      %344 = vmatpush1.bf16.msra.mxu0 0
      %345 = vmatprep.subr.bf16.mxu0 0
      %346 = vmatpush1.bf16.msra.mxu0 0
      %347 = vmatprep.mubr.bf16.mxu0 0
      %348 = vmatmul.mubr.bf16.gmra.mrb[0].mxu0 %v313
      %v349 = vpop.f32.mrb[0].mxu0
      %v350 = vadd.f32 %v298, %v349
      %v351 = vpop.f32.mrb[0].mxu0
      %v352 = vpop.f32.mrb[0].mxu0
      %v353 = vpop.f32.mrb[0].mxu0
      %354 = vdwg.mxu0
      %v355 = vmax.f32 %v350, 0.0
      %s356 = scalar_lea.vmem %s2, 16
      %v357 = vld [vmem:[%s356] sm:$0xf]
      %v358 = vld [vmem:[%s356 + $0x4] sm:$0xf]
      %v359 = vld [vmem:[%s356 + $0x8] sm:$0xf]
      %v360 = vld [vmem:[%s356 + $0xc] sm:$0xf]
      %v361 = vpack.c.bf16 %v355, %v355
      %s362 = scalar_lea.vmem %s2, 32
      %v363 = vld [vmem:[%s362] sm:$0xf]
      %v364 = vld [vmem:[%s362 + $0x4] sm:$0xf]
      %v365 = vld [vmem:[%s362 + $0x8] sm:$0xf]
      %v366 = vld [vmem:[%s362 + $0xc] sm:$0xf]
      %v367 = vpack.c.bf16 %v288, %v288
      %v372 = vunpack.c.l.b16 %v363
      %v373 = vunpack.c.l.b16 %v364
      %v374 = vunpack.c.l.b16 %v365
      %v375 = vunpack.c.l.b16 %v366
      %v376 = vpack.c.b16 %v373, %v372
      %v377 = vpack.c.b16 %v375, %v374
      %v381 = vsel %vm311, %v367, 0
      %383 = vmatprep.subr.bf16.mxu0 0
      %384 = vmatpush1.bf16.msra.mxu0 %v376
      %385 = vmatprep.subr.bf16.mxu0 0
      %386 = vmatpush1.bf16.msra.mxu0 %v377
      %387 = vmatprep.subr.bf16.mxu0 0
      %388 = vmatpush1.bf16.msra.mxu0 0
      %389 = vmatprep.subr.bf16.mxu0 0
      %390 = vmatpush1.bf16.msra.mxu0 0
      %391 = vmatprep.subr.bf16.mxu0 0
      %392 = vmatpush1.bf16.msra.mxu0 0
      %393 = vmatprep.subr.bf16.mxu0 0
      %394 = vmatpush1.bf16.msra.mxu0 0
      %395 = vmatprep.subr.bf16.mxu0 0
      %396 = vmatpush1.bf16.msra.mxu0 0
      %397 = vmatprep.subr.bf16.mxu0 0
      %398 = vmatpush1.bf16.msra.mxu0 0
      %399 = vmatprep.subr.bf16.mxu0 0
      %400 = vmatpush1.bf16.msra.mxu0 0
      %401 = vmatprep.subr.bf16.mxu0 0
      %402 = vmatpush1.bf16.msra.mxu0 0
      %403 = vmatprep.subr.bf16.mxu0 0
      %404 = vmatpush1.bf16.msra.mxu0 0
      %405 = vmatprep.subr.bf16.mxu0 0
      %406 = vmatpush1.bf16.msra.mxu0 0
      %407 = vmatprep.subr.bf16.mxu0 0
      %408 = vmatpush1.bf16.msra.mxu0 0
      %409 = vmatprep.subr.bf16.mxu0 0
      %410 = vmatpush1.bf16.msra.mxu0 0
      %411 = vmatprep.subr.bf16.mxu0 0
      %412 = vmatpush1.bf16.msra.mxu0 0
      %413 = vmatprep.subr.bf16.mxu0 0
      %414 = vmatpush1.bf16.msra.mxu0 0
      %415 = vmatprep.mubr.bf16.mxu0 0
      %416 = vmatmul.mubr.bf16.gmra.mrb[0].mxu0 %v381
      %v417 = vpop.f32.mrb[0].mxu0
      %v418 = vadd.f32 0.0, %v417
      %v419 = vpop.f32.mrb[0].mxu0
      %v420 = vpop.f32.mrb[0].mxu0
      %v421 = vpop.f32.mrb[0].mxu0
      %422 = vdwg.mxu0
      %v423 = vlaneseq
      %v424 = vshrl.u32 %v423, 7
      %v425 = vsub.s32 0, %v424
      %v426 = vrot.slane %v418, %v425
      %v431 = vunpack.c.l.b16 %v357
      %v432 = vunpack.c.l.b16 %v358
      %v433 = vunpack.c.l.b16 %v359
      %v434 = vunpack.c.l.b16 %v360
      %v435 = vpack.c.b16 %v432, %v431
      %v436 = vpack.c.b16 %v434, %v433
      %v440 = vsel %vm311, %v361, 0
      %442 = vmatprep.subr.bf16.mxu0 0
      %443 = vmatpush1.bf16.msra.mxu0 %v435
      %444 = vmatprep.subr.bf16.mxu0 0
      %445 = vmatpush1.bf16.msra.mxu0 %v436
      %446 = vmatprep.subr.bf16.mxu0 0
      %447 = vmatpush1.bf16.msra.mxu0 0
      %448 = vmatprep.subr.bf16.mxu0 0
      %449 = vmatpush1.bf16.msra.mxu0 0
      %450 = vmatprep.subr.bf16.mxu0 0
      %451 = vmatpush1.bf16.msra.mxu0 0
      %452 = vmatprep.subr.bf16.mxu0 0
      %453 = vmatpush1.bf16.msra.mxu0 0
      %454 = vmatprep.subr.bf16.mxu0 0
      %455 = vmatpush1.bf16.msra.mxu0 0
      %456 = vmatprep.subr.bf16.mxu0 0
      %457 = vmatpush1.bf16.msra.mxu0 0
      %458 = vmatprep.subr.bf16.mxu0 0
      %459 = vmatpush1.bf16.msra.mxu0 0
      %460 = vmatprep.subr.bf16.mxu0 0
      %461 = vmatpush1.bf16.msra.mxu0 0
      %462 = vmatprep.subr.bf16.mxu0 0
      %463 = vmatpush1.bf16.msra.mxu0 0
      %464 = vmatprep.subr.bf16.mxu0 0
      %465 = vmatpush1.bf16.msra.mxu0 0
      %466 = vmatprep.subr.bf16.mxu0 0
      %467 = vmatpush1.bf16.msra.mxu0 0
      %468 = vmatprep.subr.bf16.mxu0 0
      %469 = vmatpush1.bf16.msra.mxu0 0
      %470 = vmatprep.subr.bf16.mxu0 0
      %471 = vmatpush1.bf16.msra.mxu0 0
      %472 = vmatprep.subr.bf16.mxu0 0
      %473 = vmatpush1.bf16.msra.mxu0 0
      %474 = vmatprep.mubr.bf16.mxu0 0
      %475 = vmatmul.mubr.bf16.gmra.mrb[0].mxu0 %v440
      %v476 = vpop.f32.mrb[0].mxu0
      %v477 = vadd.f32 %v426, %v476
      %v478 = vpop.f32.mrb[0].mxu0
      %v479 = vpop.f32.mrb[0].mxu0
      %v480 = vpop.f32.mrb[0].mxu0
      %481 = vdwg.mxu0
      %v482 = vld [vmem:[%s3 + $0x1] sm:$0x1]
      %v483 = vlaneseq
      %v484 = vshrl.u32 %v483, 7
      %v485 = vsub.s32 0, %v484
      %v486 = vrot.slane %v482, %v485
      %v487 = vadd.f32 %v477, %v486
      %v488 = vlaneseq
      %v489 = vand.u32 %v488, 127
      %vm490 = vcmp.ge.s32.totalorder %v489, 0
      %vm491 = vcmp.lt.s32.totalorder %v489, 8
      %vm492 = vmand %vm490, %vm491
      %v493 = vsel %vm492, 1, 0
      %v494 = vcvt.s32.f32 %v493
      %vm495 = vcmp.ge.s32.totalorder %v489, 8
      %vm496 = vcmp.lt.s32.totalorder %v489, 16
      %vm497 = vmand %vm495, %vm496
      %v498 = vsel %vm497, 1, 0
      %v499 = vcvt.s32.f32 %v498
      %vm500 = vcmp.ge.s32.totalorder %v489, 16
      %vm501 = vcmp.lt.s32.totalorder %v489, 24
      %vm502 = vmand %vm500, %vm501
      %v503 = vsel %vm502, 1, 0
      %v504 = vcvt.s32.f32 %v503
      %vm505 = vcmp.ge.s32.totalorder %v489, 24
      %vm506 = vcmp.lt.s32.totalorder %v489, 32
      %vm507 = vmand %vm505, %vm506
      %v508 = vsel %vm507, 1, 0
      %v509 = vcvt.s32.f32 %v508
      %v510 = vld [vmem:[%s4] sm:$0xf]
      %v511 = vld [vmem:[%s4 + $0x8] sm:$0xf]
      %v512 = vld [vmem:[%s4 + $0x10] sm:$0xf]
      %v513 = vld [vmem:[%s4 + $0x18] sm:$0xf]
      %v514 = vld [vmem:[%s4 + $0x4] sm:$0xf]
      %v515 = vld [vmem:[%s4 + $0xc] sm:$0xf]
      %v516 = vld [vmem:[%s4 + $0x14] sm:$0xf]
      %v517 = vld [vmem:[%s4 + $0x1c] sm:$0xf]
      %v518 = vld [vmem:[%s5] sm:$0xf]
      %v519 = vld [vmem:[%s5 + $0x4] sm:$0xf]
      %v520 = vld [vmem:[%s5 + $0x8] sm:$0xf]
      %v521 = vld [vmem:[%s5 + $0xc] sm:$0xf]
      %v522 = vld [vmem:[%s5 + $0x10] sm:$0xf]
      %v523 = vld [vmem:[%s5 + $0x14] sm:$0xf]
      %v524 = vld [vmem:[%s5 + $0x18] sm:$0xf]
      %v525 = vld [vmem:[%s5 + $0x1c] sm:$0xf]
      %v526 = vld [vmem:[%s6] sm:$0x1]
      %v527 = vld [vmem:[%s6 + $0x1] sm:$0x1]
      %v528 = vld [vmem:[%s6 + $0x2] sm:$0x1]
      %v529 = vld [vmem:[%s6 + $0x3] sm:$0x1]
      %v530 = vld [vmem:[%s6 + $0x4] sm:$0x1]
      %v531 = vld [vmem:[%s6 + $0x5] sm:$0x1]
      %v532 = vld [vmem:[%s6 + $0x6] sm:$0x1]
      %v533 = vld [vmem:[%s6 + $0x7] sm:$0x1]
      %v534 = vpack.c.bf16 %v487, %v487
      %v535 = vlaneseq
      %v536 = vshrl.u32 %v535, 7
      %v537 = vsub.s32 0, %v536
      %v538 = vrot.slane %v526, %v537
      %v543 = vunpack.c.l.b16 %v510
      %v544 = vunpack.c.l.b16 %v511
      %v545 = vunpack.c.l.b16 %v512
      %v546 = vunpack.c.l.b16 %v513
      %v547 = vpack.c.b16 %v544, %v543
      %v548 = vpack.c.b16 %v546, %v545
      %v552 = vsel %vm311, %v534, 0
      %554 = vmatprep.subr.bf16.mxu0 0
      %555 = vmatpush1.bf16.msra.mxu0 %v547
      %556 = vmatprep.subr.bf16.mxu0 0
      %557 = vmatpush1.bf16.msra.mxu0 %v548
      %558 = vmatprep.subr.bf16.mxu0 0
      %559 = vmatpush1.bf16.msra.mxu0 0
      %560 = vmatprep.subr.bf16.mxu0 0
      %561 = vmatpush1.bf16.msra.mxu0 0
      %562 = vmatprep.subr.bf16.mxu0 0
      %563 = vmatpush1.bf16.msra.mxu0 0
      %564 = vmatprep.subr.bf16.mxu0 0
      %565 = vmatpush1.bf16.msra.mxu0 0
      %566 = vmatprep.subr.bf16.mxu0 0
      %567 = vmatpush1.bf16.msra.mxu0 0
      %568 = vmatprep.subr.bf16.mxu0 0
      %569 = vmatpush1.bf16.msra.mxu0 0
      %570 = vmatprep.subr.bf16.mxu0 0
      %571 = vmatpush1.bf16.msra.mxu0 0
      %572 = vmatprep.subr.bf16.mxu0 0
      %573 = vmatpush1.bf16.msra.mxu0 0
      %574 = vmatprep.subr.bf16.mxu0 0
      %575 = vmatpush1.bf16.msra.mxu0 0
      %576 = vmatprep.subr.bf16.mxu0 0
      %577 = vmatpush1.bf16.msra.mxu0 0
      %578 = vmatprep.subr.bf16.mxu0 0
      %579 = vmatpush1.bf16.msra.mxu0 0
      %580 = vmatprep.subr.bf16.mxu0 0
      %581 = vmatpush1.bf16.msra.mxu0 0
      %582 = vmatprep.subr.bf16.mxu0 0
      %583 = vmatpush1.bf16.msra.mxu0 0
      %584 = vmatprep.subr.bf16.mxu0 0
      %585 = vmatpush1.bf16.msra.mxu0 0
      %586 = vmatprep.mubr.bf16.mxu0 0
      %587 = vmatmul.mubr.bf16.gmra.mrb[0].mxu0 %v552
      %v588 = vpop.f32.mrb[0].mxu0
      %v589 = vadd.f32 %v538, %v588
      %v590 = vpop.f32.mrb[0].mxu0
      %v591 = vpop.f32.mrb[0].mxu0
      %v592 = vpop.f32.mrb[0].mxu0
      %593 = vdwg.mxu0
      %v594 = vmul.f32 %v589, 0.35355338
      %v595 = vpack.c.bf16 %v589, %v589
      %v596 = vmul.f32 %v594, %v494
      %v597 = vpack.c.bf16 %v596, %v596
      %599 = vrot.lane.b32.xlu0 %v595, 96
      %v600 = vpop.permute.xlu0 %599
      %v602 = vsel %vm311, %v597, 0
      %v605 = vsel %vm311, %v600, 0
      %607 = vmatprep.subr.bf16.mxu0 0
      %608 = vmatpush1.bf16.xpose.msra.mxu0 %v605
      %609 = vmatprep.subr.bf16.mxu0 0
      %610 = vmatpush1.bf16.xpose.msra.mxu0 0
      %611 = vmatprep.subr.bf16.mxu0 0
      %612 = vmatpush1.bf16.xpose.msra.mxu0 0
      %613 = vmatprep.subr.bf16.mxu0 0
      %614 = vmatpush1.bf16.xpose.msra.mxu0 0
      %615 = vmatprep.subr.bf16.mxu0 0
      %616 = vmatpush1.bf16.xpose.msra.mxu0 0
      %617 = vmatprep.subr.bf16.mxu0 0
      %618 = vmatpush1.bf16.xpose.msra.mxu0 0
      %619 = vmatprep.subr.bf16.mxu0 0
      %620 = vmatpush1.bf16.xpose.msra.mxu0 0
      %621 = vmatprep.subr.bf16.mxu0 0
      %622 = vmatpush1.bf16.xpose.msra.mxu0 0
      %623 = vmatprep.subr.bf16.mxu0 0
      %624 = vmatpush1.bf16.xpose.msra.mxu0 0
      %625 = vmatprep.subr.bf16.mxu0 0
      %626 = vmatpush1.bf16.xpose.msra.mxu0 0
      %627 = vmatprep.subr.bf16.mxu0 0
      %628 = vmatpush1.bf16.xpose.msra.mxu0 0
      %629 = vmatprep.subr.bf16.mxu0 0
      %630 = vmatpush1.bf16.xpose.msra.mxu0 0
      %631 = vmatprep.subr.bf16.mxu0 0
      %632 = vmatpush1.bf16.xpose.msra.mxu0 0
      %633 = vmatprep.subr.bf16.mxu0 0
      %634 = vmatpush1.bf16.xpose.msra.mxu0 0
      %635 = vmatprep.subr.bf16.mxu0 0
      %636 = vmatpush1.bf16.xpose.msra.mxu0 0
      %637 = vmatprep.subr.bf16.mxu0 0
      %638 = vmatpush1.bf16.xpose.msra.mxu0 0
      %639 = vmatprep.mubr.bf16.mxu0 0
      %640 = vmatmul.mubr.bf16.gmra.mrb[0].mxu0 %v602
      %v641 = vpop.f32.mrb[0].mxu0
      %v642 = vadd.f32 0.0, %v641
      %v643 = vpop.f32.mrb[0].mxu0
      %v644 = vpop.f32.mrb[0].mxu0
      %v645 = vpop.f32.mrb[0].mxu0
      %646 = vdwg.mxu0
      %vm647 = vcmask 64512
      %v648 = vsel %vm647, %v642, -inf
      %649 = vmax.xlane.f32.xlu0 %v648
      %v650 = vpop.xlane.xlu0 %649
      %v651 = vsub.f32 %v642, %v650
      %v652 = vmul.f32 %v651, 1.442695
      %v653 = vpow.pop %v652
      %v654 = vsel %vm647, %v653, 0.0
      %655 = vadd.xlane.f32.xlu0 %v654
      %v656 = vpop.xlane.xlu0 %655
      %v657 = vrcp.pop %v656
      %v658 = vmul.f32 %v653, %v657
      %660 = vrot.lane.b32.xlu0 %v494, 64
      %v661 = vpop.permute.xlu0 %660
      %v663 = vmul.f32 %v589, %v661
      %v664 = vpack.c.bf16 %v663, %v663
      %v665 = vpack.c.bf16 %v658, %v658
      %v666 = vmul.f32 %v594, %v499
      %v667 = vpack.c.bf16 %v666, %v666
      %v669 = vsel %vm311, %v667, 0
      %671 = vmatprep.subr.bf16.mxu0 0
      %672 = vmatpush1.bf16.xpose.msra.mxu0 %v605
      %673 = vmatprep.subr.bf16.mxu0 0
      %674 = vmatpush1.bf16.xpose.msra.mxu0 0
      %675 = vmatprep.subr.bf16.mxu0 0
      %676 = vmatpush1.bf16.xpose.msra.mxu0 0
      %677 = vmatprep.subr.bf16.mxu0 0
      %678 = vmatpush1.bf16.xpose.msra.mxu0 0
      %679 = vmatprep.subr.bf16.mxu0 0
      %680 = vmatpush1.bf16.xpose.msra.mxu0 0
      %681 = vmatprep.subr.bf16.mxu0 0
      %682 = vmatpush1.bf16.xpose.msra.mxu0 0
      %683 = vmatprep.subr.bf16.mxu0 0
      %684 = vmatpush1.bf16.xpose.msra.mxu0 0
      %685 = vmatprep.subr.bf16.mxu0 0
      %686 = vmatpush1.bf16.xpose.msra.mxu0 0
      %687 = vmatprep.subr.bf16.mxu0 0
      %688 = vmatpush1.bf16.xpose.msra.mxu0 0
      %689 = vmatprep.subr.bf16.mxu0 0
      %690 = vmatpush1.bf16.xpose.msra.mxu0 0
      %691 = vmatprep.subr.bf16.mxu0 0
      %692 = vmatpush1.bf16.xpose.msra.mxu0 0
      %693 = vmatprep.subr.bf16.mxu0 0
      %694 = vmatpush1.bf16.xpose.msra.mxu0 0
      %695 = vmatprep.subr.bf16.mxu0 0
      %696 = vmatpush1.bf16.xpose.msra.mxu0 0
      %697 = vmatprep.subr.bf16.mxu0 0
      %698 = vmatpush1.bf16.xpose.msra.mxu0 0
      %699 = vmatprep.subr.bf16.mxu0 0
      %700 = vmatpush1.bf16.xpose.msra.mxu0 0
      %701 = vmatprep.subr.bf16.mxu0 0
      %702 = vmatpush1.bf16.xpose.msra.mxu0 0
      %703 = vmatprep.mubr.bf16.mxu0 0
      %704 = vmatmul.mubr.bf16.gmra.mrb[0].mxu0 %v669
      %v705 = vpop.f32.mrb[0].mxu0
      %v706 = vadd.f32 0.0, %v705
      %v707 = vpop.f32.mrb[0].mxu0
      %v708 = vpop.f32.mrb[0].mxu0
      %v709 = vpop.f32.mrb[0].mxu0
      %710 = vdwg.mxu0
      %v711 = vsel %vm647, %v706, -inf
      %712 = vmax.xlane.f32.xlu0 %v711
      %v713 = vpop.xlane.xlu0 %712
      %v714 = vsub.f32 %v706, %v713
      %v715 = vmul.f32 %v714, 1.442695
      %v716 = vpow.pop %v715
      %v717 = vsel %vm647, %v716, 0.0
      %718 = vadd.xlane.f32.xlu0 %v717
      %v719 = vpop.xlane.xlu0 %718
      %v720 = vrcp.pop %v719
      %v721 = vmul.f32 %v716, %v720
      %723 = vrot.lane.b32.xlu0 %v499, 64
      %v724 = vpop.permute.xlu0 %723
      %v726 = vmul.f32 %v589, %v724
      %v727 = vpack.c.bf16 %v726, %v726
      %v728 = vpack.c.bf16 %v721, %v721
      %730 = vrot.lane.b32.xlu0 %v727, 64
      %v731 = vpop.permute.xlu0 %730
      %v733 = vsel %vm647, %v728, 0
      %vm735 = vcmask 1043456
      %v737 = vsel %vm735, %v731, 0
      %739 = vmatprep.subr.bf16.mxu0 0
      %740 = vmatpush1.bf16.msra.mxu0 %v737
      %741 = vmatprep.subr.bf16.mxu0 0
      %742 = vmatpush1.bf16.msra.mxu0 0
      %743 = vmatprep.subr.bf16.mxu0 0
      %744 = vmatpush1.bf16.msra.mxu0 0
      %745 = vmatprep.subr.bf16.mxu0 0
      %746 = vmatpush1.bf16.msra.mxu0 0
      %747 = vmatprep.subr.bf16.mxu0 0
      %748 = vmatpush1.bf16.msra.mxu0 0
      %749 = vmatprep.subr.bf16.mxu0 0
      %750 = vmatpush1.bf16.msra.mxu0 0
      %751 = vmatprep.subr.bf16.mxu0 0
      %752 = vmatpush1.bf16.msra.mxu0 0
      %753 = vmatprep.subr.bf16.mxu0 0
      %754 = vmatpush1.bf16.msra.mxu0 0
      %755 = vmatprep.subr.bf16.mxu0 0
      %756 = vmatpush1.bf16.msra.mxu0 0
      %757 = vmatprep.subr.bf16.mxu0 0
      %758 = vmatpush1.bf16.msra.mxu0 0
      %759 = vmatprep.subr.bf16.mxu0 0
      %760 = vmatpush1.bf16.msra.mxu0 0
      %761 = vmatprep.subr.bf16.mxu0 0
      %762 = vmatpush1.bf16.msra.mxu0 0
      %763 = vmatprep.subr.bf16.mxu0 0
      %764 = vmatpush1.bf16.msra.mxu0 0
      %765 = vmatprep.subr.bf16.mxu0 0
      %766 = vmatpush1.bf16.msra.mxu0 0
      %767 = vmatprep.subr.bf16.mxu0 0
      %768 = vmatpush1.bf16.msra.mxu0 0
      %769 = vmatprep.subr.bf16.mxu0 0
      %770 = vmatpush1.bf16.msra.mxu0 0
      %771 = vmatprep.mubr.bf16.mxu0 0
      %772 = vmatmul.mubr.bf16.gmra.mrb[0].mxu0 %v733
      %v773 = vpop.f32.mrb[0].mxu0
      %v774 = vadd.f32 0.0, %v773
      %v775 = vpop.f32.mrb[0].mxu0
      %v776 = vpop.f32.mrb[0].mxu0
      %v777 = vpop.f32.mrb[0].mxu0
      %778 = vdwg.mxu0
      %780 = vrot.lane.b32.xlu0 %v664, 64
      %v781 = vpop.permute.xlu0 %780
      %v783 = vsel %vm647, %v665, 0
      %v786 = vsel %vm735, %v781, 0
      %788 = vmatprep.subr.bf16.mxu0 0
      %789 = vmatpush1.bf16.msra.mxu0 %v786
      %790 = vmatprep.subr.bf16.mxu0 0
      %791 = vmatpush1.bf16.msra.mxu0 0
      %792 = vmatprep.subr.bf16.mxu0 0
      %793 = vmatpush1.bf16.msra.mxu0 0
      %794 = vmatprep.subr.bf16.mxu0 0
      %795 = vmatpush1.bf16.msra.mxu0 0
      %796 = vmatprep.subr.bf16.mxu0 0
      %797 = vmatpush1.bf16.msra.mxu0 0
      %798 = vmatprep.subr.bf16.mxu0 0
      %799 = vmatpush1.bf16.msra.mxu0 0
      %800 = vmatprep.subr.bf16.mxu0 0
      %801 = vmatpush1.bf16.msra.mxu0 0
      %802 = vmatprep.subr.bf16.mxu0 0
      %803 = vmatpush1.bf16.msra.mxu0 0
      %804 = vmatprep.subr.bf16.mxu0 0
      %805 = vmatpush1.bf16.msra.mxu0 0
      %806 = vmatprep.subr.bf16.mxu0 0
      %807 = vmatpush1.bf16.msra.mxu0 0
      %808 = vmatprep.subr.bf16.mxu0 0
      %809 = vmatpush1.bf16.msra.mxu0 0
      %810 = vmatprep.subr.bf16.mxu0 0
      %811 = vmatpush1.bf16.msra.mxu0 0
      %812 = vmatprep.subr.bf16.mxu0 0
      %813 = vmatpush1.bf16.msra.mxu0 0
      %814 = vmatprep.subr.bf16.mxu0 0
      %815 = vmatpush1.bf16.msra.mxu0 0
      %816 = vmatprep.subr.bf16.mxu0 0
      %817 = vmatpush1.bf16.msra.mxu0 0
      %818 = vmatprep.subr.bf16.mxu0 0
      %819 = vmatpush1.bf16.msra.mxu0 0
      %820 = vmatprep.mubr.bf16.mxu0 0
      %821 = vmatmul.mubr.bf16.gmra.mrb[0].mxu0 %v783
      %v822 = vpop.f32.mrb[0].mxu0
      %v823 = vadd.f32 %v774, %v822
      %v824 = vpop.f32.mrb[0].mxu0
      %v825 = vpop.f32.mrb[0].mxu0
      %v826 = vpop.f32.mrb[0].mxu0
      %827 = vdwg.mxu0
      %v828 = vmul.f32 %v594, %v504
      %v829 = vpack.c.bf16 %v828, %v828
      %v831 = vsel %vm311, %v829, 0
      %833 = vmatprep.subr.bf16.mxu0 0
      %834 = vmatpush1.bf16.xpose.msra.mxu0 %v605
      %835 = vmatprep.subr.bf16.mxu0 0
      %836 = vmatpush1.bf16.xpose.msra.mxu0 0
      %837 = vmatprep.subr.bf16.mxu0 0
      %838 = vmatpush1.bf16.xpose.msra.mxu0 0
      %839 = vmatprep.subr.bf16.mxu0 0
      %840 = vmatpush1.bf16.xpose.msra.mxu0 0
      %841 = vmatprep.subr.bf16.mxu0 0
      %842 = vmatpush1.bf16.xpose.msra.mxu0 0
      %843 = vmatprep.subr.bf16.mxu0 0
      %844 = vmatpush1.bf16.xpose.msra.mxu0 0
      %845 = vmatprep.subr.bf16.mxu0 0
      %846 = vmatpush1.bf16.xpose.msra.mxu0 0
      %847 = vmatprep.subr.bf16.mxu0 0
      %848 = vmatpush1.bf16.xpose.msra.mxu0 0
      %849 = vmatprep.subr.bf16.mxu0 0
      %850 = vmatpush1.bf16.xpose.msra.mxu0 0
      %851 = vmatprep.subr.bf16.mxu0 0
      %852 = vmatpush1.bf16.xpose.msra.mxu0 0
      %853 = vmatprep.subr.bf16.mxu0 0
      %854 = vmatpush1.bf16.xpose.msra.mxu0 0
      %855 = vmatprep.subr.bf16.mxu0 0
      %856 = vmatpush1.bf16.xpose.msra.mxu0 0
      %857 = vmatprep.subr.bf16.mxu0 0
      %858 = vmatpush1.bf16.xpose.msra.mxu0 0
      %859 = vmatprep.subr.bf16.mxu0 0
      %860 = vmatpush1.bf16.xpose.msra.mxu0 0
      %861 = vmatprep.subr.bf16.mxu0 0
      %862 = vmatpush1.bf16.xpose.msra.mxu0 0
      %863 = vmatprep.subr.bf16.mxu0 0
      %864 = vmatpush1.bf16.xpose.msra.mxu0 0
      %865 = vmatprep.mubr.bf16.mxu0 0
      %866 = vmatmul.mubr.bf16.gmra.mrb[0].mxu0 %v831
      %v867 = vpop.f32.mrb[0].mxu0
      %v868 = vadd.f32 0.0, %v867
      %v869 = vpop.f32.mrb[0].mxu0
      %v870 = vpop.f32.mrb[0].mxu0
      %v871 = vpop.f32.mrb[0].mxu0
      %872 = vdwg.mxu0
      %v873 = vsel %vm647, %v868, -inf
      %874 = vmax.xlane.f32.xlu0 %v873
      %v875 = vpop.xlane.xlu0 %874
      %v876 = vsub.f32 %v868, %v875
      %v877 = vmul.f32 %v876, 1.442695
      %v878 = vpow.pop %v877
      %v879 = vsel %vm647, %v878, 0.0
      %880 = vadd.xlane.f32.xlu0 %v879
      %v881 = vpop.xlane.xlu0 %880
      %v882 = vrcp.pop %v881
      %v883 = vmul.f32 %v878, %v882
      %885 = vrot.lane.b32.xlu0 %v504, 64
      %v886 = vpop.permute.xlu0 %885
      %v888 = vmul.f32 %v589, %v886
      %v889 = vpack.c.bf16 %v888, %v888
      %v890 = vpack.c.bf16 %v883, %v883
      %892 = vrot.lane.b32.xlu0 %v889, 64
      %v893 = vpop.permute.xlu0 %892
      %v895 = vsel %vm647, %v890, 0
      %v898 = vsel %vm735, %v893, 0
      %900 = vmatprep.subr.bf16.mxu0 0
      %901 = vmatpush1.bf16.msra.mxu0 %v898
      %902 = vmatprep.subr.bf16.mxu0 0
      %903 = vmatpush1.bf16.msra.mxu0 0
      %904 = vmatprep.subr.bf16.mxu0 0
      %905 = vmatpush1.bf16.msra.mxu0 0
      %906 = vmatprep.subr.bf16.mxu0 0
      %907 = vmatpush1.bf16.msra.mxu0 0
      %908 = vmatprep.subr.bf16.mxu0 0
      %909 = vmatpush1.bf16.msra.mxu0 0
      %910 = vmatprep.subr.bf16.mxu0 0
      %911 = vmatpush1.bf16.msra.mxu0 0
      %912 = vmatprep.subr.bf16.mxu0 0
      %913 = vmatpush1.bf16.msra.mxu0 0
      %914 = vmatprep.subr.bf16.mxu0 0
      %915 = vmatpush1.bf16.msra.mxu0 0
      %916 = vmatprep.subr.bf16.mxu0 0
      %917 = vmatpush1.bf16.msra.mxu0 0
      %918 = vmatprep.subr.bf16.mxu0 0
      %919 = vmatpush1.bf16.msra.mxu0 0
      %920 = vmatprep.subr.bf16.mxu0 0
      %921 = vmatpush1.bf16.msra.mxu0 0
      %922 = vmatprep.subr.bf16.mxu0 0
      %923 = vmatpush1.bf16.msra.mxu0 0
      %924 = vmatprep.subr.bf16.mxu0 0
      %925 = vmatpush1.bf16.msra.mxu0 0
      %926 = vmatprep.subr.bf16.mxu0 0
      %927 = vmatpush1.bf16.msra.mxu0 0
      %928 = vmatprep.subr.bf16.mxu0 0
      %929 = vmatpush1.bf16.msra.mxu0 0
      %930 = vmatprep.subr.bf16.mxu0 0
      %931 = vmatpush1.bf16.msra.mxu0 0
      %932 = vmatprep.mubr.bf16.mxu0 0
      %933 = vmatmul.mubr.bf16.gmra.mrb[0].mxu0 %v895
      %v934 = vpop.f32.mrb[0].mxu0
      %v935 = vadd.f32 0.0, %v934
      %v936 = vpop.f32.mrb[0].mxu0
      %v937 = vpop.f32.mrb[0].mxu0
      %v938 = vpop.f32.mrb[0].mxu0
      %939 = vdwg.mxu0
      %v940 = vadd.f32 %v823, %v935
      %v941 = vmul.f32 %v594, %v509
      %v942 = vpack.c.bf16 %v941, %v941
      %v944 = vsel %vm311, %v942, 0
      %946 = vmatprep.subr.bf16.mxu0 0
      %947 = vmatpush1.bf16.xpose.msra.mxu0 %v605
      %948 = vmatprep.subr.bf16.mxu0 0
      %949 = vmatpush1.bf16.xpose.msra.mxu0 0
      %950 = vmatprep.subr.bf16.mxu0 0
      %951 = vmatpush1.bf16.xpose.msra.mxu0 0
      %952 = vmatprep.subr.bf16.mxu0 0
      %953 = vmatpush1.bf16.xpose.msra.mxu0 0
      %954 = vmatprep.subr.bf16.mxu0 0
      %955 = vmatpush1.bf16.xpose.msra.mxu0 0
      %956 = vmatprep.subr.bf16.mxu0 0
      %957 = vmatpush1.bf16.xpose.msra.mxu0 0
      %958 = vmatprep.subr.bf16.mxu0 0
      %959 = vmatpush1.bf16.xpose.msra.mxu0 0
      %960 = vmatprep.subr.bf16.mxu0 0
      %961 = vmatpush1.bf16.xpose.msra.mxu0 0
      %962 = vmatprep.subr.bf16.mxu0 0
      %963 = vmatpush1.bf16.xpose.msra.mxu0 0
      %964 = vmatprep.subr.bf16.mxu0 0
      %965 = vmatpush1.bf16.xpose.msra.mxu0 0
      %966 = vmatprep.subr.bf16.mxu0 0
      %967 = vmatpush1.bf16.xpose.msra.mxu0 0
      %968 = vmatprep.subr.bf16.mxu0 0
      %969 = vmatpush1.bf16.xpose.msra.mxu0 0
      %970 = vmatprep.subr.bf16.mxu0 0
      %971 = vmatpush1.bf16.xpose.msra.mxu0 0
      %972 = vmatprep.subr.bf16.mxu0 0
      %973 = vmatpush1.bf16.xpose.msra.mxu0 0
      %974 = vmatprep.subr.bf16.mxu0 0
      %975 = vmatpush1.bf16.xpose.msra.mxu0 0
      %976 = vmatprep.subr.bf16.mxu0 0
      %977 = vmatpush1.bf16.xpose.msra.mxu0 0
      %978 = vmatprep.mubr.bf16.mxu0 0
      %979 = vmatmul.mubr.bf16.gmra.mrb[0].mxu0 %v944
      %v980 = vpop.f32.mrb[0].mxu0
      %v981 = vadd.f32 0.0, %v980
      %v982 = vpop.f32.mrb[0].mxu0
      %v983 = vpop.f32.mrb[0].mxu0
      %v984 = vpop.f32.mrb[0].mxu0
      %985 = vdwg.mxu0
      %v986 = vsel %vm647, %v981, -inf
      %987 = vmax.xlane.f32.xlu0 %v986
      %v988 = vpop.xlane.xlu0 %987
      %v989 = vsub.f32 %v981, %v988
      %v990 = vmul.f32 %v989, 1.442695
      %v991 = vpow.pop %v990
      %v992 = vsel %vm647, %v991, 0.0
      %993 = vadd.xlane.f32.xlu0 %v992
      %v994 = vpop.xlane.xlu0 %993
      %v995 = vrcp.pop %v994
      %v996 = vmul.f32 %v991, %v995
      %998 = vrot.lane.b32.xlu0 %v509, 64
      %v999 = vpop.permute.xlu0 %998
      %v1001 = vmul.f32 %v589, %v999
      %v1002 = vpack.c.bf16 %v1001, %v1001
      %v1003 = vpack.c.bf16 %v996, %v996
      %1005 = vrot.lane.b32.xlu0 %v1002, 64
      %v1006 = vpop.permute.xlu0 %1005
      %v1008 = vsel %vm647, %v1003, 0
      %v1011 = vsel %vm735, %v1006, 0
      %1013 = vmatprep.subr.bf16.mxu0 0
      %1014 = vmatpush1.bf16.msra.mxu0 %v1011
      %1015 = vmatprep.subr.bf16.mxu0 0
      %1016 = vmatpush1.bf16.msra.mxu0 0
      %1017 = vmatprep.subr.bf16.mxu0 0
      %1018 = vmatpush1.bf16.msra.mxu0 0
      %1019 = vmatprep.subr.bf16.mxu0 0
      %1020 = vmatpush1.bf16.msra.mxu0 0
      %1021 = vmatprep.subr.bf16.mxu0 0
      %1022 = vmatpush1.bf16.msra.mxu0 0
      %1023 = vmatprep.subr.bf16.mxu0 0
      %1024 = vmatpush1.bf16.msra.mxu0 0
      %1025 = vmatprep.subr.bf16.mxu0 0
      %1026 = vmatpush1.bf16.msra.mxu0 0
      %1027 = vmatprep.subr.bf16.mxu0 0
      %1028 = vmatpush1.bf16.msra.mxu0 0
      %1029 = vmatprep.subr.bf16.mxu0 0
      %1030 = vmatpush1.bf16.msra.mxu0 0
      %1031 = vmatprep.subr.bf16.mxu0 0
      %1032 = vmatpush1.bf16.msra.mxu0 0
      %1033 = vmatprep.subr.bf16.mxu0 0
      %1034 = vmatpush1.bf16.msra.mxu0 0
      %1035 = vmatprep.subr.bf16.mxu0 0
      %1036 = vmatpush1.bf16.msra.mxu0 0
      %1037 = vmatprep.subr.bf16.mxu0 0
      %1038 = vmatpush1.bf16.msra.mxu0 0
      %1039 = vmatprep.subr.bf16.mxu0 0
      %1040 = vmatpush1.bf16.msra.mxu0 0
      %1041 = vmatprep.subr.bf16.mxu0 0
      %1042 = vmatpush1.bf16.msra.mxu0 0
      %1043 = vmatprep.subr.bf16.mxu0 0
      %1044 = vmatpush1.bf16.msra.mxu0 0
      %1045 = vmatprep.mubr.bf16.mxu0 0
      %1046 = vmatmul.mubr.bf16.gmra.mrb[0].mxu0 %v1008
      %v1047 = vpop.f32.mrb[0].mxu0
      %v1048 = vadd.f32 0.0, %v1047
      %v1049 = vpop.f32.mrb[0].mxu0
      %v1050 = vpop.f32.mrb[0].mxu0
      %v1051 = vpop.f32.mrb[0].mxu0
      %1052 = vdwg.mxu0
      %v1053 = vadd.f32 %v940, %v1048
      %v1054 = vpack.c.bf16 %v1053, %v1053
      %1055 = vrot.lane.b32.xlu0 %v547, 32
      %v1056 = vpop.permute.xlu0 %1055
      %1057 = vrot.lane.b32.xlu0 %v548, 32
      %v1058 = vpop.permute.xlu0 %1057
      %v1062 = vsel %vm311, %v1054, 0
      %1064 = vmatprep.subr.bf16.mxu0 0
      %1065 = vmatpush1.bf16.msra.mxu0 %v1056
      %1066 = vmatprep.subr.bf16.mxu0 0
      %1067 = vmatpush1.bf16.msra.mxu0 %v1058
      %1068 = vmatprep.subr.bf16.mxu0 0
      %1069 = vmatpush1.bf16.msra.mxu0 0
      %1070 = vmatprep.subr.bf16.mxu0 0
      %1071 = vmatpush1.bf16.msra.mxu0 0
      %1072 = vmatprep.subr.bf16.mxu0 0
      %1073 = vmatpush1.bf16.msra.mxu0 0
      %1074 = vmatprep.subr.bf16.mxu0 0
      %1075 = vmatpush1.bf16.msra.mxu0 0
      %1076 = vmatprep.subr.bf16.mxu0 0
      %1077 = vmatpush1.bf16.msra.mxu0 0
      %1078 = vmatprep.subr.bf16.mxu0 0
      %1079 = vmatpush1.bf16.msra.mxu0 0
      %1080 = vmatprep.subr.bf16.mxu0 0
      %1081 = vmatpush1.bf16.msra.mxu0 0
      %1082 = vmatprep.subr.bf16.mxu0 0
      %1083 = vmatpush1.bf16.msra.mxu0 0
      %1084 = vmatprep.subr.bf16.mxu0 0
      %1085 = vmatpush1.bf16.msra.mxu0 0
      %1086 = vmatprep.subr.bf16.mxu0 0
      %1087 = vmatpush1.bf16.msra.mxu0 0
      %1088 = vmatprep.subr.bf16.mxu0 0
      %1089 = vmatpush1.bf16.msra.mxu0 0
      %1090 = vmatprep.subr.bf16.mxu0 0
      %1091 = vmatpush1.bf16.msra.mxu0 0
      %1092 = vmatprep.subr.bf16.mxu0 0
      %1093 = vmatpush1.bf16.msra.mxu0 0
      %1094 = vmatprep.subr.bf16.mxu0 0
      %1095 = vmatpush1.bf16.msra.mxu0 0
      %1096 = vmatprep.mubr.bf16.mxu0 0
      %1097 = vmatmul.mubr.bf16.gmra.mrb[0].mxu0 %v1062
      %v1098 = vpop.f32.mrb[0].mxu0
      %v1099 = vadd.f32 0.0, %v1098
      %v1100 = vpop.f32.mrb[0].mxu0
      %v1101 = vpop.f32.mrb[0].mxu0
      %v1102 = vpop.f32.mrb[0].mxu0
      %1103 = vdwg.mxu0
      %v1104 = vadd.f32 %v487, %v1099
      %v1105 = vlaneseq
      %v1106 = vshrl.u32 %v1105, 7
      %v1107 = vsub.s32 0, %v1106
      %v1108 = vrot.slane %v527, %v1107
      %v1109 = vadd.f32 %v1104, %v1108
      %v1110 = vsel %vm311, %v1109, 0.0
      %1111 = vadd.xlane.f32.xlu0 %v1110
      %v1112 = vpop.xlane.xlu0 %1111
      %v1113 = vrcp.pop 32.0
      %v1114 = vmul.f32 %v1112, %v1113
      %v1115 = vsub.f32 %v1109, %v1114
      %v1116 = vmul.f32 %v1115, %v1115
      %v1117 = vsel %vm311, %v1116, 0.0
      %1118 = vadd.xlane.f32.xlu0 %v1117
      %v1119 = vpop.xlane.xlu0 %1118
      %v1120 = vmul.f32 %v1119, %v1113
      %v1121 = vadd.f32 %v1120, 1e-05
      %v1122 = vrsqrt.pop %v1121
      %v1123 = vmul.f32 %v1115, %v1122
      %v1124 = vlaneseq
      %v1125 = vshrl.u32 %v1124, 7
      %v1126 = vsub.s32 0, %v1125
      %v1127 = vrot.slane %v528, %v1126
      %v1128 = vmul.f32 %v1123, %v1127
      %v1129 = vlaneseq
      %v1130 = vshrl.u32 %v1129, 7
      %v1131 = vsub.s32 0, %v1130
      %v1132 = vrot.slane %v529, %v1131
      %v1133 = vadd.f32 %v1128, %v1132
      %v1134 = vpack.c.bf16 %v1133, %v1133
      %v1135 = vlaneseq
      %v1136 = vshrl.u32 %v1135, 7
      %v1137 = vsub.s32 0, %v1136
      %v1138 = vrot.slane %v530, %v1137
      %v1143 = vunpack.c.l.b16 %v514
      %v1144 = vunpack.c.l.b16 %v515
      %v1145 = vunpack.c.l.b16 %v516
      %v1146 = vunpack.c.l.b16 %v517
      %v1147 = vpack.c.b16 %v1144, %v1143
      %v1148 = vpack.c.b16 %v1146, %v1145
      %v1152 = vsel %vm311, %v1134, 0
      %1154 = vmatprep.subr.bf16.mxu0 0
      %1155 = vmatpush1.bf16.msra.mxu0 %v1147
      %1156 = vmatprep.subr.bf16.mxu0 0
      %1157 = vmatpush1.bf16.msra.mxu0 %v1148
      %1158 = vmatprep.subr.bf16.mxu0 0
      %1159 = vmatpush1.bf16.msra.mxu0 0
      %1160 = vmatprep.subr.bf16.mxu0 0
      %1161 = vmatpush1.bf16.msra.mxu0 0
      %1162 = vmatprep.subr.bf16.mxu0 0
      %1163 = vmatpush1.bf16.msra.mxu0 0
      %1164 = vmatprep.subr.bf16.mxu0 0
      %1165 = vmatpush1.bf16.msra.mxu0 0
      %1166 = vmatprep.subr.bf16.mxu0 0
      %1167 = vmatpush1.bf16.msra.mxu0 0
      %1168 = vmatprep.subr.bf16.mxu0 0
      %1169 = vmatpush1.bf16.msra.mxu0 0
      %1170 = vmatprep.subr.bf16.mxu0 0
      %1171 = vmatpush1.bf16.msra.mxu0 0
      %1172 = vmatprep.subr.bf16.mxu0 0
      %1173 = vmatpush1.bf16.msra.mxu0 0
      %1174 = vmatprep.subr.bf16.mxu0 0
      %1175 = vmatpush1.bf16.msra.mxu0 0
      %1176 = vmatprep.subr.bf16.mxu0 0
      %1177 = vmatpush1.bf16.msra.mxu0 0
      %1178 = vmatprep.subr.bf16.mxu0 0
      %1179 = vmatpush1.bf16.msra.mxu0 0
      %1180 = vmatprep.subr.bf16.mxu0 0
      %1181 = vmatpush1.bf16.msra.mxu0 0
      %1182 = vmatprep.subr.bf16.mxu0 0
      %1183 = vmatpush1.bf16.msra.mxu0 0
      %1184 = vmatprep.subr.bf16.mxu0 0
      %1185 = vmatpush1.bf16.msra.mxu0 0
      %1186 = vmatprep.mubr.bf16.mxu0 0
      %1187 = vmatmul.mubr.bf16.gmra.mrb[0].mxu0 %v1152
      %v1188 = vpop.f32.mrb[0].mxu0
      %v1189 = vadd.f32 %v1138, %v1188
      %v1190 = vpop.f32.mrb[0].mxu0
      %v1191 = vpop.f32.mrb[0].mxu0
      %v1192 = vpop.f32.mrb[0].mxu0
      %1193 = vdwg.mxu0
      %v1194 = vmax.f32 %v1189, 0.0
      %v1195 = vpack.c.bf16 %v1194, %v1194
      %v1204 = vunpack.c.l.b16 %v518
      %v1205 = vunpack.c.l.b16 %v519
      %v1206 = vunpack.c.l.b16 %v520
      %v1207 = vunpack.c.l.b16 %v521
      %v1208 = vunpack.c.l.b16 %v522
      %v1209 = vunpack.c.l.b16 %v523
      %v1210 = vunpack.c.l.b16 %v524
      %v1211 = vunpack.c.l.b16 %v525
      %v1212 = vpack.c.b16 %v1205, %v1204
      %v1213 = vpack.c.b16 %v1207, %v1206
      %v1214 = vpack.c.b16 %v1209, %v1208
      %v1215 = vpack.c.b16 %v1211, %v1210
      %vm1220 = vcmask 523264
      %v1222 = vsel %vm1220, %v1195, 0
      %1224 = vmatprep.subr.bf16.mxu0 0
      %1225 = vmatpush1.bf16.msra.mxu0 %v1212
      %1226 = vmatprep.subr.bf16.mxu0 0
      %1227 = vmatpush1.bf16.msra.mxu0 %v1213
      %1228 = vmatprep.subr.bf16.mxu0 0
      %1229 = vmatpush1.bf16.msra.mxu0 %v1214
      %1230 = vmatprep.subr.bf16.mxu0 0
      %1231 = vmatpush1.bf16.msra.mxu0 %v1215
      %1232 = vmatprep.subr.bf16.mxu0 0
      %1233 = vmatpush1.bf16.msra.mxu0 0
      %1234 = vmatprep.subr.bf16.mxu0 0
      %1235 = vmatpush1.bf16.msra.mxu0 0
      %1236 = vmatprep.subr.bf16.mxu0 0
      %1237 = vmatpush1.bf16.msra.mxu0 0
      %1238 = vmatprep.subr.bf16.mxu0 0
      %1239 = vmatpush1.bf16.msra.mxu0 0
      %1240 = vmatprep.subr.bf16.mxu0 0
      %1241 = vmatpush1.bf16.msra.mxu0 0
      %1242 = vmatprep.subr.bf16.mxu0 0
      %1243 = vmatpush1.bf16.msra.mxu0 0
      %1244 = vmatprep.subr.bf16.mxu0 0
      %1245 = vmatpush1.bf16.msra.mxu0 0
      %1246 = vmatprep.subr.bf16.mxu0 0
      %1247 = vmatpush1.bf16.msra.mxu0 0
      %1248 = vmatprep.subr.bf16.mxu0 0
      %1249 = vmatpush1.bf16.msra.mxu0 0
      %1250 = vmatprep.subr.bf16.mxu0 0
      %1251 = vmatpush1.bf16.msra.mxu0 0
      %1252 = vmatprep.subr.bf16.mxu0 0
      %1253 = vmatpush1.bf16.msra.mxu0 0
      %1254 = vmatprep.subr.bf16.mxu0 0
      %1255 = vmatpush1.bf16.msra.mxu0 0
      %1256 = vmatprep.mubr.bf16.mxu0 0
      %1257 = vmatmul.mubr.bf16.gmra.mrb[0].mxu0 %v1222
      %v1258 = vpop.f32.mrb[0].mxu0
      %v1259 = vadd.f32 0.0, %v1258
      %v1260 = vpop.f32.mrb[0].mxu0
      %v1261 = vpop.f32.mrb[0].mxu0
      %v1262 = vpop.f32.mrb[0].mxu0
      %1263 = vdwg.mxu0
      %v1264 = vadd.f32 %v1133, %v1259
      %v1265 = vlaneseq
      %v1266 = vshrl.u32 %v1265, 7
      %v1267 = vsub.s32 0, %v1266
      %v1268 = vrot.slane %v531, %v1267
      %v1269 = vadd.f32 %v1264, %v1268
      %v1270 = vsel %vm311, %v1269, 0.0
      %1271 = vadd.xlane.f32.xlu0 %v1270
      %v1272 = vpop.xlane.xlu0 %1271
      %v1273 = vmul.f32 %v1272, %v1113
      %v1274 = vsub.f32 %v1269, %v1273
      %v1275 = vmul.f32 %v1274, %v1274
      %v1276 = vsel %vm311, %v1275, 0.0
      %1277 = vadd.xlane.f32.xlu0 %v1276
      %v1278 = vpop.xlane.xlu0 %1277
      %v1279 = vmul.f32 %v1278, %v1113
      %v1280 = vadd.f32 %v1279, 1e-05
      %v1281 = vrsqrt.pop %v1280
      %v1282 = vmul.f32 %v1274, %v1281
      %v1283 = vlaneseq
      %v1284 = vshrl.u32 %v1283, 7
      %v1285 = vsub.s32 0, %v1284
      %v1286 = vrot.slane %v532, %v1285
      %v1287 = vmul.f32 %v1282, %v1286
      %v1288 = vlaneseq
      %v1289 = vshrl.u32 %v1288, 7
      %v1290 = vsub.s32 0, %v1289
      %v1291 = vrot.slane %v533, %v1290
      %v1292 = vadd.f32 %v1287, %v1291
      %s1293 = scalar_lea.vmem %s4, 32
      %v1294 = vld [vmem:[%s1293] sm:$0xf]
      %v1295 = vld [vmem:[%s1293 + $0x8] sm:$0xf]
      %v1296 = vld [vmem:[%s1293 + $0x10] sm:$0xf]
      %v1297 = vld [vmem:[%s1293 + $0x18] sm:$0xf]
      %v1298 = vld [vmem:[%s1293 + $0x4] sm:$0xf]
      %v1299 = vld [vmem:[%s1293 + $0xc] sm:$0xf]
      %v1300 = vld [vmem:[%s1293 + $0x14] sm:$0xf]
      %v1301 = vld [vmem:[%s1293 + $0x1c] sm:$0xf]
      %s1302 = scalar_lea.vmem %s5, 32
      %v1303 = vld [vmem:[%s1302] sm:$0xf]
      %v1304 = vld [vmem:[%s1302 + $0x4] sm:$0xf]
      %v1305 = vld [vmem:[%s1302 + $0x8] sm:$0xf]
      %v1306 = vld [vmem:[%s1302 + $0xc] sm:$0xf]
      %v1307 = vld [vmem:[%s1302 + $0x10] sm:$0xf]
      %v1308 = vld [vmem:[%s1302 + $0x14] sm:$0xf]
      %v1309 = vld [vmem:[%s1302 + $0x18] sm:$0xf]
      %v1310 = vld [vmem:[%s1302 + $0x1c] sm:$0xf]
      %s1311 = scalar_lea.vmem %s6, 8
      %v1312 = vld [vmem:[%s1311] sm:$0x1]
      %v1313 = vld [vmem:[%s1311 + $0x1] sm:$0x1]
      %v1314 = vld [vmem:[%s1311 + $0x2] sm:$0x1]
      %v1315 = vld [vmem:[%s1311 + $0x3] sm:$0x1]
      %v1316 = vld [vmem:[%s1311 + $0x4] sm:$0x1]
      %v1317 = vld [vmem:[%s1311 + $0x5] sm:$0x1]
      %v1318 = vld [vmem:[%s1311 + $0x6] sm:$0x1]
      %v1319 = vld [vmem:[%s1311 + $0x7] sm:$0x1]
      %v1320 = vpack.c.bf16 %v1292, %v1292
      %v1321 = vlaneseq
      %v1322 = vshrl.u32 %v1321, 7
      %v1323 = vsub.s32 0, %v1322
      %v1324 = vrot.slane %v1312, %v1323
      %v1329 = vunpack.c.l.b16 %v1294
      %v1330 = vunpack.c.l.b16 %v1295
      %v1331 = vunpack.c.l.b16 %v1296
      %v1332 = vunpack.c.l.b16 %v1297
      %v1333 = vpack.c.b16 %v1330, %v1329
      %v1334 = vpack.c.b16 %v1332, %v1331
      %v1338 = vsel %vm311, %v1320, 0
      %1340 = vmatprep.subr.bf16.mxu0 0
      %1341 = vmatpush1.bf16.msra.mxu0 %v1333
      %1342 = vmatprep.subr.bf16.mxu0 0
      %1343 = vmatpush1.bf16.msra.mxu0 %v1334
      %1344 = vmatprep.subr.bf16.mxu0 0
      %1345 = vmatpush1.bf16.msra.mxu0 0
      %1346 = vmatprep.subr.bf16.mxu0 0
      %1347 = vmatpush1.bf16.msra.mxu0 0
      %1348 = vmatprep.subr.bf16.mxu0 0
      %1349 = vmatpush1.bf16.msra.mxu0 0
      %1350 = vmatprep.subr.bf16.mxu0 0
      %1351 = vmatpush1.bf16.msra.mxu0 0
      %1352 = vmatprep.subr.bf16.mxu0 0
      %1353 = vmatpush1.bf16.msra.mxu0 0
      %1354 = vmatprep.subr.bf16.mxu0 0
      %1355 = vmatpush1.bf16.msra.mxu0 0
      %1356 = vmatprep.subr.bf16.mxu0 0
      %1357 = vmatpush1.bf16.msra.mxu0 0
      %1358 = vmatprep.subr.bf16.mxu0 0
      %1359 = vmatpush1.bf16.msra.mxu0 0
      %1360 = vmatprep.subr.bf16.mxu0 0
      %1361 = vmatpush1.bf16.msra.mxu0 0
      %1362 = vmatprep.subr.bf16.mxu0 0
      %1363 = vmatpush1.bf16.msra.mxu0 0
      %1364 = vmatprep.subr.bf16.mxu0 0
      %1365 = vmatpush1.bf16.msra.mxu0 0
      %1366 = vmatprep.subr.bf16.mxu0 0
      %1367 = vmatpush1.bf16.msra.mxu0 0
      %1368 = vmatprep.subr.bf16.mxu0 0
      %1369 = vmatpush1.bf16.msra.mxu0 0
      %1370 = vmatprep.subr.bf16.mxu0 0
      %1371 = vmatpush1.bf16.msra.mxu0 0
      %1372 = vmatprep.mubr.bf16.mxu0 0
      %1373 = vmatmul.mubr.bf16.gmra.mrb[0].mxu0 %v1338
      %v1374 = vpop.f32.mrb[0].mxu0
      %v1375 = vadd.f32 %v1324, %v1374
      %v1376 = vpop.f32.mrb[0].mxu0
      %v1377 = vpop.f32.mrb[0].mxu0
      %v1378 = vpop.f32.mrb[0].mxu0
      %1379 = vdwg.mxu0
      %v1380 = vmul.f32 %v1375, 0.35355338
      %v1381 = vpack.c.bf16 %v1375, %v1375
      %v1382 = vmul.f32 %v1380, %v494
      %v1383 = vpack.c.bf16 %v1382, %v1382
      %1385 = vrot.lane.b32.xlu0 %v1381, 96
      %v1386 = vpop.permute.xlu0 %1385
      %v1388 = vsel %vm311, %v1383, 0
      %v1391 = vsel %vm311, %v1386, 0
      %1393 = vmatprep.subr.bf16.mxu0 0
      %1394 = vmatpush1.bf16.xpose.msra.mxu0 %v1391
      %1395 = vmatprep.subr.bf16.mxu0 0
      %1396 = vmatpush1.bf16.xpose.msra.mxu0 0
      %1397 = vmatprep.subr.bf16.mxu0 0
      %1398 = vmatpush1.bf16.xpose.msra.mxu0 0
      %1399 = vmatprep.subr.bf16.mxu0 0
      %1400 = vmatpush1.bf16.xpose.msra.mxu0 0
      %1401 = vmatprep.subr.bf16.mxu0 0
      %1402 = vmatpush1.bf16.xpose.msra.mxu0 0
      %1403 = vmatprep.subr.bf16.mxu0 0
      %1404 = vmatpush1.bf16.xpose.msra.mxu0 0
      %1405 = vmatprep.subr.bf16.mxu0 0
      %1406 = vmatpush1.bf16.xpose.msra.mxu0 0
      %1407 = vmatprep.subr.bf16.mxu0 0
      %1408 = vmatpush1.bf16.xpose.msra.mxu0 0
      %1409 = vmatprep.subr.bf16.mxu0 0
      %1410 = vmatpush1.bf16.xpose.msra.mxu0 0
      %1411 = vmatprep.subr.bf16.mxu0 0
      %1412 = vmatpush1.bf16.xpose.msra.mxu0 0
      %1413 = vmatprep.subr.bf16.mxu0 0
      %1414 = vmatpush1.bf16.xpose.msra.mxu0 0
      %1415 = vmatprep.subr.bf16.mxu0 0
      %1416 = vmatpush1.bf16.xpose.msra.mxu0 0
      %1417 = vmatprep.subr.bf16.mxu0 0
      %1418 = vmatpush1.bf16.xpose.msra.mxu0 0
      %1419 = vmatprep.subr.bf16.mxu0 0
      %1420 = vmatpush1.bf16.xpose.msra.mxu0 0
      %1421 = vmatprep.subr.bf16.mxu0 0
      %1422 = vmatpush1.bf16.xpose.msra.mxu0 0
      %1423 = vmatprep.subr.bf16.mxu0 0
      %1424 = vmatpush1.bf16.xpose.msra.mxu0 0
      %1425 = vmatprep.mubr.bf16.mxu0 0
      %1426 = vmatmul.mubr.bf16.gmra.mrb[0].mxu0 %v1388
      %v1427 = vpop.f32.mrb[0].mxu0
      %v1428 = vadd.f32 0.0, %v1427
      %v1429 = vpop.f32.mrb[0].mxu0
      %v1430 = vpop.f32.mrb[0].mxu0
      %v1431 = vpop.f32.mrb[0].mxu0
      %1432 = vdwg.mxu0
      %v1433 = vsel %vm647, %v1428, -inf
      %1434 = vmax.xlane.f32.xlu0 %v1433
      %v1435 = vpop.xlane.xlu0 %1434
      %v1436 = vsub.f32 %v1428, %v1435
      %v1437 = vmul.f32 %v1436, 1.442695
      %v1438 = vpow.pop %v1437
      %v1439 = vsel %vm647, %v1438, 0.0
      %1440 = vadd.xlane.f32.xlu0 %v1439
      %v1441 = vpop.xlane.xlu0 %1440
      %v1442 = vrcp.pop %v1441
      %v1443 = vmul.f32 %v1438, %v1442
      %v1444 = vmul.f32 %v1375, %v661
      %v1445 = vpack.c.bf16 %v1444, %v1444
      %v1446 = vpack.c.bf16 %v1443, %v1443
      %v1447 = vmul.f32 %v1380, %v499
      %v1448 = vpack.c.bf16 %v1447, %v1447
      %v1450 = vsel %vm311, %v1448, 0
      %1452 = vmatprep.subr.bf16.mxu0 0
      %1453 = vmatpush1.bf16.xpose.msra.mxu0 %v1391
      %1454 = vmatprep.subr.bf16.mxu0 0
      %1455 = vmatpush1.bf16.xpose.msra.mxu0 0
      %1456 = vmatprep.subr.bf16.mxu0 0
      %1457 = vmatpush1.bf16.xpose.msra.mxu0 0
      %1458 = vmatprep.subr.bf16.mxu0 0
      %1459 = vmatpush1.bf16.xpose.msra.mxu0 0
      %1460 = vmatprep.subr.bf16.mxu0 0
      %1461 = vmatpush1.bf16.xpose.msra.mxu0 0
      %1462 = vmatprep.subr.bf16.mxu0 0
      %1463 = vmatpush1.bf16.xpose.msra.mxu0 0
      %1464 = vmatprep.subr.bf16.mxu0 0
      %1465 = vmatpush1.bf16.xpose.msra.mxu0 0
      %1466 = vmatprep.subr.bf16.mxu0 0
      %1467 = vmatpush1.bf16.xpose.msra.mxu0 0
      %1468 = vmatprep.subr.bf16.mxu0 0
      %1469 = vmatpush1.bf16.xpose.msra.mxu0 0
      %1470 = vmatprep.subr.bf16.mxu0 0
      %1471 = vmatpush1.bf16.xpose.msra.mxu0 0
      %1472 = vmatprep.subr.bf16.mxu0 0
      %1473 = vmatpush1.bf16.xpose.msra.mxu0 0
      %1474 = vmatprep.subr.bf16.mxu0 0
      %1475 = vmatpush1.bf16.xpose.msra.mxu0 0
      %1476 = vmatprep.subr.bf16.mxu0 0
      %1477 = vmatpush1.bf16.xpose.msra.mxu0 0
      %1478 = vmatprep.subr.bf16.mxu0 0
      %1479 = vmatpush1.bf16.xpose.msra.mxu0 0
      %1480 = vmatprep.subr.bf16.mxu0 0
      %1481 = vmatpush1.bf16.xpose.msra.mxu0 0
      %1482 = vmatprep.subr.bf16.mxu0 0
      %1483 = vmatpush1.bf16.xpose.msra.mxu0 0
      %1484 = vmatprep.mubr.bf16.mxu0 0
      %1485 = vmatmul.mubr.bf16.gmra.mrb[0].mxu0 %v1450
      %v1486 = vpop.f32.mrb[0].mxu0
      %v1487 = vadd.f32 0.0, %v1486
      %v1488 = vpop.f32.mrb[0].mxu0
      %v1489 = vpop.f32.mrb[0].mxu0
      %v1490 = vpop.f32.mrb[0].mxu0
      %1491 = vdwg.mxu0
      %v1492 = vsel %vm647, %v1487, -inf
      %1493 = vmax.xlane.f32.xlu0 %v1492
      %v1494 = vpop.xlane.xlu0 %1493
      %v1495 = vsub.f32 %v1487, %v1494
      %v1496 = vmul.f32 %v1495, 1.442695
      %v1497 = vpow.pop %v1496
      %v1498 = vsel %vm647, %v1497, 0.0
      %1499 = vadd.xlane.f32.xlu0 %v1498
      %v1500 = vpop.xlane.xlu0 %1499
      %v1501 = vrcp.pop %v1500
      %v1502 = vmul.f32 %v1497, %v1501
      %v1503 = vmul.f32 %v1375, %v724
      %v1504 = vpack.c.bf16 %v1503, %v1503
      %v1505 = vpack.c.bf16 %v1502, %v1502
      %1507 = vrot.lane.b32.xlu0 %v1504, 64
      %v1508 = vpop.permute.xlu0 %1507
      %v1510 = vsel %vm647, %v1505, 0
      %v1513 = vsel %vm735, %v1508, 0
      %1515 = vmatprep.subr.bf16.mxu0 0
      %1516 = vmatpush1.bf16.msra.mxu0 %v1513
      %1517 = vmatprep.subr.bf16.mxu0 0
      %1518 = vmatpush1.bf16.msra.mxu0 0
      %1519 = vmatprep.subr.bf16.mxu0 0
      %1520 = vmatpush1.bf16.msra.mxu0 0
      %1521 = vmatprep.subr.bf16.mxu0 0
      %1522 = vmatpush1.bf16.msra.mxu0 0
      %1523 = vmatprep.subr.bf16.mxu0 0
      %1524 = vmatpush1.bf16.msra.mxu0 0
      %1525 = vmatprep.subr.bf16.mxu0 0
      %1526 = vmatpush1.bf16.msra.mxu0 0
      %1527 = vmatprep.subr.bf16.mxu0 0
      %1528 = vmatpush1.bf16.msra.mxu0 0
      %1529 = vmatprep.subr.bf16.mxu0 0
      %1530 = vmatpush1.bf16.msra.mxu0 0
      %1531 = vmatprep.subr.bf16.mxu0 0
      %1532 = vmatpush1.bf16.msra.mxu0 0
      %1533 = vmatprep.subr.bf16.mxu0 0
      %1534 = vmatpush1.bf16.msra.mxu0 0
      %1535 = vmatprep.subr.bf16.mxu0 0
      %1536 = vmatpush1.bf16.msra.mxu0 0
      %1537 = vmatprep.subr.bf16.mxu0 0
      %1538 = vmatpush1.bf16.msra.mxu0 0
      %1539 = vmatprep.subr.bf16.mxu0 0
      %1540 = vmatpush1.bf16.msra.mxu0 0
      %1541 = vmatprep.subr.bf16.mxu0 0
      %1542 = vmatpush1.bf16.msra.mxu0 0
      %1543 = vmatprep.subr.bf16.mxu0 0
      %1544 = vmatpush1.bf16.msra.mxu0 0
      %1545 = vmatprep.subr.bf16.mxu0 0
      %1546 = vmatpush1.bf16.msra.mxu0 0
      %1547 = vmatprep.mubr.bf16.mxu0 0
      %1548 = vmatmul.mubr.bf16.gmra.mrb[0].mxu0 %v1510
      %v1549 = vpop.f32.mrb[0].mxu0
      %v1550 = vadd.f32 0.0, %v1549
      %v1551 = vpop.f32.mrb[0].mxu0
      %v1552 = vpop.f32.mrb[0].mxu0
      %v1553 = vpop.f32.mrb[0].mxu0
      %1554 = vdwg.mxu0
      %1556 = vrot.lane.b32.xlu0 %v1445, 64
      %v1557 = vpop.permute.xlu0 %1556
      %v1559 = vsel %vm647, %v1446, 0
      %v1562 = vsel %vm735, %v1557, 0
      %1564 = vmatprep.subr.bf16.mxu0 0
      %1565 = vmatpush1.bf16.msra.mxu0 %v1562
      %1566 = vmatprep.subr.bf16.mxu0 0
      %1567 = vmatpush1.bf16.msra.mxu0 0
      %1568 = vmatprep.subr.bf16.mxu0 0
      %1569 = vmatpush1.bf16.msra.mxu0 0
      %1570 = vmatprep.subr.bf16.mxu0 0
      %1571 = vmatpush1.bf16.msra.mxu0 0
      %1572 = vmatprep.subr.bf16.mxu0 0
      %1573 = vmatpush1.bf16.msra.mxu0 0
      %1574 = vmatprep.subr.bf16.mxu0 0
      %1575 = vmatpush1.bf16.msra.mxu0 0
      %1576 = vmatprep.subr.bf16.mxu0 0
      %1577 = vmatpush1.bf16.msra.mxu0 0
      %1578 = vmatprep.subr.bf16.mxu0 0
      %1579 = vmatpush1.bf16.msra.mxu0 0
      %1580 = vmatprep.subr.bf16.mxu0 0
      %1581 = vmatpush1.bf16.msra.mxu0 0
      %1582 = vmatprep.subr.bf16.mxu0 0
      %1583 = vmatpush1.bf16.msra.mxu0 0
      %1584 = vmatprep.subr.bf16.mxu0 0
      %1585 = vmatpush1.bf16.msra.mxu0 0
      %1586 = vmatprep.subr.bf16.mxu0 0
      %1587 = vmatpush1.bf16.msra.mxu0 0
      %1588 = vmatprep.subr.bf16.mxu0 0
      %1589 = vmatpush1.bf16.msra.mxu0 0
      %1590 = vmatprep.subr.bf16.mxu0 0
      %1591 = vmatpush1.bf16.msra.mxu0 0
      %1592 = vmatprep.subr.bf16.mxu0 0
      %1593 = vmatpush1.bf16.msra.mxu0 0
      %1594 = vmatprep.subr.bf16.mxu0 0
      %1595 = vmatpush1.bf16.msra.mxu0 0
      %1596 = vmatprep.mubr.bf16.mxu0 0
      %1597 = vmatmul.mubr.bf16.gmra.mrb[0].mxu0 %v1559
      %v1598 = vpop.f32.mrb[0].mxu0
      %v1599 = vadd.f32 %v1550, %v1598
      %v1600 = vpop.f32.mrb[0].mxu0
      %v1601 = vpop.f32.mrb[0].mxu0
      %v1602 = vpop.f32.mrb[0].mxu0
      %1603 = vdwg.mxu0
      %v1604 = vmul.f32 %v1380, %v504
      %v1605 = vpack.c.bf16 %v1604, %v1604
      %v1607 = vsel %vm311, %v1605, 0
      %1609 = vmatprep.subr.bf16.mxu0 0
      %1610 = vmatpush1.bf16.xpose.msra.mxu0 %v1391
      %1611 = vmatprep.subr.bf16.mxu0 0
      %1612 = vmatpush1.bf16.xpose.msra.mxu0 0
      %1613 = vmatprep.subr.bf16.mxu0 0
      %1614 = vmatpush1.bf16.xpose.msra.mxu0 0
      %1615 = vmatprep.subr.bf16.mxu0 0
      %1616 = vmatpush1.bf16.xpose.msra.mxu0 0
      %1617 = vmatprep.subr.bf16.mxu0 0
      %1618 = vmatpush1.bf16.xpose.msra.mxu0 0
      %1619 = vmatprep.subr.bf16.mxu0 0
      %1620 = vmatpush1.bf16.xpose.msra.mxu0 0
      %1621 = vmatprep.subr.bf16.mxu0 0
      %1622 = vmatpush1.bf16.xpose.msra.mxu0 0
      %1623 = vmatprep.subr.bf16.mxu0 0
      %1624 = vmatpush1.bf16.xpose.msra.mxu0 0
      %1625 = vmatprep.subr.bf16.mxu0 0
      %1626 = vmatpush1.bf16.xpose.msra.mxu0 0
      %1627 = vmatprep.subr.bf16.mxu0 0
      %1628 = vmatpush1.bf16.xpose.msra.mxu0 0
      %1629 = vmatprep.subr.bf16.mxu0 0
      %1630 = vmatpush1.bf16.xpose.msra.mxu0 0
      %1631 = vmatprep.subr.bf16.mxu0 0
      %1632 = vmatpush1.bf16.xpose.msra.mxu0 0
      %1633 = vmatprep.subr.bf16.mxu0 0
      %1634 = vmatpush1.bf16.xpose.msra.mxu0 0
      %1635 = vmatprep.subr.bf16.mxu0 0
      %1636 = vmatpush1.bf16.xpose.msra.mxu0 0
      %1637 = vmatprep.subr.bf16.mxu0 0
      %1638 = vmatpush1.bf16.xpose.msra.mxu0 0
      %1639 = vmatprep.subr.bf16.mxu0 0
      %1640 = vmatpush1.bf16.xpose.msra.mxu0 0
      %1641 = vmatprep.mubr.bf16.mxu0 0
      %1642 = vmatmul.mubr.bf16.gmra.mrb[0].mxu0 %v1607
      %v1643 = vpop.f32.mrb[0].mxu0
      %v1644 = vadd.f32 0.0, %v1643
      %v1645 = vpop.f32.mrb[0].mxu0
      %v1646 = vpop.f32.mrb[0].mxu0
      %v1647 = vpop.f32.mrb[0].mxu0
      %1648 = vdwg.mxu0
      %v1649 = vsel %vm647, %v1644, -inf
      %1650 = vmax.xlane.f32.xlu0 %v1649
      %v1651 = vpop.xlane.xlu0 %1650
      %v1652 = vsub.f32 %v1644, %v1651
      %v1653 = vmul.f32 %v1652, 1.442695
      %v1654 = vpow.pop %v1653
      %v1655 = vsel %vm647, %v1654, 0.0
      %1656 = vadd.xlane.f32.xlu0 %v1655
      %v1657 = vpop.xlane.xlu0 %1656
      %v1658 = vrcp.pop %v1657
      %v1659 = vmul.f32 %v1654, %v1658
      %v1660 = vmul.f32 %v1375, %v886
      %v1661 = vpack.c.bf16 %v1660, %v1660
      %v1662 = vpack.c.bf16 %v1659, %v1659
      %1664 = vrot.lane.b32.xlu0 %v1661, 64
      %v1665 = vpop.permute.xlu0 %1664
      %v1667 = vsel %vm647, %v1662, 0
      %v1670 = vsel %vm735, %v1665, 0
      %1672 = vmatprep.subr.bf16.mxu0 0
      %1673 = vmatpush1.bf16.msra.mxu0 %v1670
      %1674 = vmatprep.subr.bf16.mxu0 0
      %1675 = vmatpush1.bf16.msra.mxu0 0
      %1676 = vmatprep.subr.bf16.mxu0 0
      %1677 = vmatpush1.bf16.msra.mxu0 0
      %1678 = vmatprep.subr.bf16.mxu0 0
      %1679 = vmatpush1.bf16.msra.mxu0 0
      %1680 = vmatprep.subr.bf16.mxu0 0
      %1681 = vmatpush1.bf16.msra.mxu0 0
      %1682 = vmatprep.subr.bf16.mxu0 0
      %1683 = vmatpush1.bf16.msra.mxu0 0
      %1684 = vmatprep.subr.bf16.mxu0 0
      %1685 = vmatpush1.bf16.msra.mxu0 0
      %1686 = vmatprep.subr.bf16.mxu0 0
      %1687 = vmatpush1.bf16.msra.mxu0 0
      %1688 = vmatprep.subr.bf16.mxu0 0
      %1689 = vmatpush1.bf16.msra.mxu0 0
      %1690 = vmatprep.subr.bf16.mxu0 0
      %1691 = vmatpush1.bf16.msra.mxu0 0
      %1692 = vmatprep.subr.bf16.mxu0 0
      %1693 = vmatpush1.bf16.msra.mxu0 0
      %1694 = vmatprep.subr.bf16.mxu0 0
      %1695 = vmatpush1.bf16.msra.mxu0 0
      %1696 = vmatprep.subr.bf16.mxu0 0
      %1697 = vmatpush1.bf16.msra.mxu0 0
      %1698 = vmatprep.subr.bf16.mxu0 0
      %1699 = vmatpush1.bf16.msra.mxu0 0
      %1700 = vmatprep.subr.bf16.mxu0 0
      %1701 = vmatpush1.bf16.msra.mxu0 0
      %1702 = vmatprep.subr.bf16.mxu0 0
      %1703 = vmatpush1.bf16.msra.mxu0 0
      %1704 = vmatprep.mubr.bf16.mxu0 0
      %1705 = vmatmul.mubr.bf16.gmra.mrb[0].mxu0 %v1667
      %v1706 = vpop.f32.mrb[0].mxu0
      %v1707 = vadd.f32 0.0, %v1706
      %v1708 = vpop.f32.mrb[0].mxu0
      %v1709 = vpop.f32.mrb[0].mxu0
      %v1710 = vpop.f32.mrb[0].mxu0
      %1711 = vdwg.mxu0
      %v1712 = vadd.f32 %v1599, %v1707
      %v1713 = vmul.f32 %v1380, %v509
      %v1714 = vpack.c.bf16 %v1713, %v1713
      %v1716 = vsel %vm311, %v1714, 0
      %1718 = vmatprep.subr.bf16.mxu0 0
      %1719 = vmatpush1.bf16.xpose.msra.mxu0 %v1391
      %1720 = vmatprep.subr.bf16.mxu0 0
      %1721 = vmatpush1.bf16.xpose.msra.mxu0 0
      %1722 = vmatprep.subr.bf16.mxu0 0
      %1723 = vmatpush1.bf16.xpose.msra.mxu0 0
      %1724 = vmatprep.subr.bf16.mxu0 0
      %1725 = vmatpush1.bf16.xpose.msra.mxu0 0
      %1726 = vmatprep.subr.bf16.mxu0 0
      %1727 = vmatpush1.bf16.xpose.msra.mxu0 0
      %1728 = vmatprep.subr.bf16.mxu0 0
      %1729 = vmatpush1.bf16.xpose.msra.mxu0 0
      %1730 = vmatprep.subr.bf16.mxu0 0
      %1731 = vmatpush1.bf16.xpose.msra.mxu0 0
      %1732 = vmatprep.subr.bf16.mxu0 0
      %1733 = vmatpush1.bf16.xpose.msra.mxu0 0
      %1734 = vmatprep.subr.bf16.mxu0 0
      %1735 = vmatpush1.bf16.xpose.msra.mxu0 0
      %1736 = vmatprep.subr.bf16.mxu0 0
      %1737 = vmatpush1.bf16.xpose.msra.mxu0 0
      %1738 = vmatprep.subr.bf16.mxu0 0
      %1739 = vmatpush1.bf16.xpose.msra.mxu0 0
      %1740 = vmatprep.subr.bf16.mxu0 0
      %1741 = vmatpush1.bf16.xpose.msra.mxu0 0
      %1742 = vmatprep.subr.bf16.mxu0 0
      %1743 = vmatpush1.bf16.xpose.msra.mxu0 0
      %1744 = vmatprep.subr.bf16.mxu0 0
      %1745 = vmatpush1.bf16.xpose.msra.mxu0 0
      %1746 = vmatprep.subr.bf16.mxu0 0
      %1747 = vmatpush1.bf16.xpose.msra.mxu0 0
      %1748 = vmatprep.subr.bf16.mxu0 0
      %1749 = vmatpush1.bf16.xpose.msra.mxu0 0
      %1750 = vmatprep.mubr.bf16.mxu0 0
      %1751 = vmatmul.mubr.bf16.gmra.mrb[0].mxu0 %v1716
      %v1752 = vpop.f32.mrb[0].mxu0
      %v1753 = vadd.f32 0.0, %v1752
      %v1754 = vpop.f32.mrb[0].mxu0
      %v1755 = vpop.f32.mrb[0].mxu0
      %v1756 = vpop.f32.mrb[0].mxu0
      %1757 = vdwg.mxu0
      %v1758 = vsel %vm647, %v1753, -inf
      %1759 = vmax.xlane.f32.xlu0 %v1758
      %v1760 = vpop.xlane.xlu0 %1759
      %v1761 = vsub.f32 %v1753, %v1760
      %v1762 = vmul.f32 %v1761, 1.442695
      %v1763 = vpow.pop %v1762
      %v1764 = vsel %vm647, %v1763, 0.0
      %1765 = vadd.xlane.f32.xlu0 %v1764
      %v1766 = vpop.xlane.xlu0 %1765
      %v1767 = vrcp.pop %v1766
      %v1768 = vmul.f32 %v1763, %v1767
      %v1769 = vmul.f32 %v1375, %v999
      %v1770 = vpack.c.bf16 %v1769, %v1769
      %v1771 = vpack.c.bf16 %v1768, %v1768
      %1773 = vrot.lane.b32.xlu0 %v1770, 64
      %v1774 = vpop.permute.xlu0 %1773
      %v1776 = vsel %vm647, %v1771, 0
      %v1779 = vsel %vm735, %v1774, 0
      %1781 = vmatprep.subr.bf16.mxu0 0
      %1782 = vmatpush1.bf16.msra.mxu0 %v1779
      %1783 = vmatprep.subr.bf16.mxu0 0
      %1784 = vmatpush1.bf16.msra.mxu0 0
      %1785 = vmatprep.subr.bf16.mxu0 0
      %1786 = vmatpush1.bf16.msra.mxu0 0
      %1787 = vmatprep.subr.bf16.mxu0 0
      %1788 = vmatpush1.bf16.msra.mxu0 0
      %1789 = vmatprep.subr.bf16.mxu0 0
      %1790 = vmatpush1.bf16.msra.mxu0 0
      %1791 = vmatprep.subr.bf16.mxu0 0
      %1792 = vmatpush1.bf16.msra.mxu0 0
      %1793 = vmatprep.subr.bf16.mxu0 0
      %1794 = vmatpush1.bf16.msra.mxu0 0
      %1795 = vmatprep.subr.bf16.mxu0 0
      %1796 = vmatpush1.bf16.msra.mxu0 0
      %1797 = vmatprep.subr.bf16.mxu0 0
      %1798 = vmatpush1.bf16.msra.mxu0 0
      %1799 = vmatprep.subr.bf16.mxu0 0
      %1800 = vmatpush1.bf16.msra.mxu0 0
      %1801 = vmatprep.subr.bf16.mxu0 0
      %1802 = vmatpush1.bf16.msra.mxu0 0
      %1803 = vmatprep.subr.bf16.mxu0 0
      %1804 = vmatpush1.bf16.msra.mxu0 0
      %1805 = vmatprep.subr.bf16.mxu0 0
      %1806 = vmatpush1.bf16.msra.mxu0 0
      %1807 = vmatprep.subr.bf16.mxu0 0
      %1808 = vmatpush1.bf16.msra.mxu0 0
      %1809 = vmatprep.subr.bf16.mxu0 0
      %1810 = vmatpush1.bf16.msra.mxu0 0
      %1811 = vmatprep.subr.bf16.mxu0 0
      %1812 = vmatpush1.bf16.msra.mxu0 0
      %1813 = vmatprep.mubr.bf16.mxu0 0
      %1814 = vmatmul.mubr.bf16.gmra.mrb[0].mxu0 %v1776
      %v1815 = vpop.f32.mrb[0].mxu0
      %v1816 = vadd.f32 0.0, %v1815
      %v1817 = vpop.f32.mrb[0].mxu0
      %v1818 = vpop.f32.mrb[0].mxu0
      %v1819 = vpop.f32.mrb[0].mxu0
      %1820 = vdwg.mxu0
      %v1821 = vadd.f32 %v1712, %v1816
      %v1822 = vpack.c.bf16 %v1821, %v1821
      %1823 = vrot.lane.b32.xlu0 %v1333, 32
      %v1824 = vpop.permute.xlu0 %1823
      %1825 = vrot.lane.b32.xlu0 %v1334, 32
      %v1826 = vpop.permute.xlu0 %1825
      %v1830 = vsel %vm311, %v1822, 0
      %1832 = vmatprep.subr.bf16.mxu0 0
      %1833 = vmatpush1.bf16.msra.mxu0 %v1824
      %1834 = vmatprep.subr.bf16.mxu0 0
      %1835 = vmatpush1.bf16.msra.mxu0 %v1826
      %1836 = vmatprep.subr.bf16.mxu0 0
      %1837 = vmatpush1.bf16.msra.mxu0 0
      %1838 = vmatprep.subr.bf16.mxu0 0
      %1839 = vmatpush1.bf16.msra.mxu0 0
      %1840 = vmatprep.subr.bf16.mxu0 0
      %1841 = vmatpush1.bf16.msra.mxu0 0
      %1842 = vmatprep.subr.bf16.mxu0 0
      %1843 = vmatpush1.bf16.msra.mxu0 0
      %1844 = vmatprep.subr.bf16.mxu0 0
      %1845 = vmatpush1.bf16.msra.mxu0 0
      %1846 = vmatprep.subr.bf16.mxu0 0
      %1847 = vmatpush1.bf16.msra.mxu0 0
      %1848 = vmatprep.subr.bf16.mxu0 0
      %1849 = vmatpush1.bf16.msra.mxu0 0
      %1850 = vmatprep.subr.bf16.mxu0 0
      %1851 = vmatpush1.bf16.msra.mxu0 0
      %1852 = vmatprep.subr.bf16.mxu0 0
      %1853 = vmatpush1.bf16.msra.mxu0 0
      %1854 = vmatprep.subr.bf16.mxu0 0
      %1855 = vmatpush1.bf16.msra.mxu0 0
      %1856 = vmatprep.subr.bf16.mxu0 0
      %1857 = vmatpush1.bf16.msra.mxu0 0
      %1858 = vmatprep.subr.bf16.mxu0 0
      %1859 = vmatpush1.bf16.msra.mxu0 0
      %1860 = vmatprep.subr.bf16.mxu0 0
      %1861 = vmatpush1.bf16.msra.mxu0 0
      %1862 = vmatprep.subr.bf16.mxu0 0
      %1863 = vmatpush1.bf16.msra.mxu0 0
      %1864 = vmatprep.mubr.bf16.mxu0 0
      %1865 = vmatmul.mubr.bf16.gmra.mrb[0].mxu0 %v1830
      %v1866 = vpop.f32.mrb[0].mxu0
      %v1867 = vadd.f32 0.0, %v1866
      %v1868 = vpop.f32.mrb[0].mxu0
      %v1869 = vpop.f32.mrb[0].mxu0
      %v1870 = vpop.f32.mrb[0].mxu0
      %1871 = vdwg.mxu0
      %v1872 = vadd.f32 %v1292, %v1867
      %v1873 = vlaneseq
      %v1874 = vshrl.u32 %v1873, 7
      %v1875 = vsub.s32 0, %v1874
      %v1876 = vrot.slane %v1313, %v1875
      %v1877 = vadd.f32 %v1872, %v1876
      %v1878 = vsel %vm311, %v1877, 0.0
      %1879 = vadd.xlane.f32.xlu0 %v1878
      %v1880 = vpop.xlane.xlu0 %1879
      %v1881 = vmul.f32 %v1880, %v1113
      %v1882 = vsub.f32 %v1877, %v1881
      %v1883 = vmul.f32 %v1882, %v1882
      %v1884 = vsel %vm311, %v1883, 0.0
      %1885 = vadd.xlane.f32.xlu0 %v1884
      %v1886 = vpop.xlane.xlu0 %1885
      %v1887 = vmul.f32 %v1886, %v1113
      %v1888 = vadd.f32 %v1887, 1e-05
      %v1889 = vrsqrt.pop %v1888
      %v1890 = vmul.f32 %v1882, %v1889
      %v1891 = vlaneseq
      %v1892 = vshrl.u32 %v1891, 7
      %v1893 = vsub.s32 0, %v1892
      %v1894 = vrot.slane %v1314, %v1893
      %v1895 = vmul.f32 %v1890, %v1894
      %v1896 = vlaneseq
      %v1897 = vshrl.u32 %v1896, 7
      %v1898 = vsub.s32 0, %v1897
      %v1899 = vrot.slane %v1315, %v1898
      %v1900 = vadd.f32 %v1895, %v1899
      %v1901 = vpack.c.bf16 %v1900, %v1900
      %v1902 = vlaneseq
      %v1903 = vshrl.u32 %v1902, 7
      %v1904 = vsub.s32 0, %v1903
      %v1905 = vrot.slane %v1316, %v1904
      %v1910 = vunpack.c.l.b16 %v1298
      %v1911 = vunpack.c.l.b16 %v1299
      %v1912 = vunpack.c.l.b16 %v1300
      %v1913 = vunpack.c.l.b16 %v1301
      %v1914 = vpack.c.b16 %v1911, %v1910
      %v1915 = vpack.c.b16 %v1913, %v1912
      %v1919 = vsel %vm311, %v1901, 0
      %1921 = vmatprep.subr.bf16.mxu0 0
      %1922 = vmatpush1.bf16.msra.mxu0 %v1914
      %1923 = vmatprep.subr.bf16.mxu0 0
      %1924 = vmatpush1.bf16.msra.mxu0 %v1915
      %1925 = vmatprep.subr.bf16.mxu0 0
      %1926 = vmatpush1.bf16.msra.mxu0 0
      %1927 = vmatprep.subr.bf16.mxu0 0
      %1928 = vmatpush1.bf16.msra.mxu0 0
      %1929 = vmatprep.subr.bf16.mxu0 0
      %1930 = vmatpush1.bf16.msra.mxu0 0
      %1931 = vmatprep.subr.bf16.mxu0 0
      %1932 = vmatpush1.bf16.msra.mxu0 0
      %1933 = vmatprep.subr.bf16.mxu0 0
      %1934 = vmatpush1.bf16.msra.mxu0 0
      %1935 = vmatprep.subr.bf16.mxu0 0
      %1936 = vmatpush1.bf16.msra.mxu0 0
      %1937 = vmatprep.subr.bf16.mxu0 0
      %1938 = vmatpush1.bf16.msra.mxu0 0
      %1939 = vmatprep.subr.bf16.mxu0 0
      %1940 = vmatpush1.bf16.msra.mxu0 0
      %1941 = vmatprep.subr.bf16.mxu0 0
      %1942 = vmatpush1.bf16.msra.mxu0 0
      %1943 = vmatprep.subr.bf16.mxu0 0
      %1944 = vmatpush1.bf16.msra.mxu0 0
      %1945 = vmatprep.subr.bf16.mxu0 0
      %1946 = vmatpush1.bf16.msra.mxu0 0
      %1947 = vmatprep.subr.bf16.mxu0 0
      %1948 = vmatpush1.bf16.msra.mxu0 0
      %1949 = vmatprep.subr.bf16.mxu0 0
      %1950 = vmatpush1.bf16.msra.mxu0 0
      %1951 = vmatprep.subr.bf16.mxu0 0
      %1952 = vmatpush1.bf16.msra.mxu0 0
      %1953 = vmatprep.mubr.bf16.mxu0 0
      %1954 = vmatmul.mubr.bf16.gmra.mrb[0].mxu0 %v1919
      %v1955 = vpop.f32.mrb[0].mxu0
      %v1956 = vadd.f32 %v1905, %v1955
      %v1957 = vpop.f32.mrb[0].mxu0
      %v1958 = vpop.f32.mrb[0].mxu0
      %v1959 = vpop.f32.mrb[0].mxu0
      %1960 = vdwg.mxu0
      %v1961 = vmax.f32 %v1956, 0.0
      %v1962 = vpack.c.bf16 %v1961, %v1961
      %v1971 = vunpack.c.l.b16 %v1303
      %v1972 = vunpack.c.l.b16 %v1304
      %v1973 = vunpack.c.l.b16 %v1305
      %v1974 = vunpack.c.l.b16 %v1306
      %v1975 = vunpack.c.l.b16 %v1307
      %v1976 = vunpack.c.l.b16 %v1308
      %v1977 = vunpack.c.l.b16 %v1309
      %v1978 = vunpack.c.l.b16 %v1310
      %v1979 = vpack.c.b16 %v1972, %v1971
      %v1980 = vpack.c.b16 %v1974, %v1973
      %v1981 = vpack.c.b16 %v1976, %v1975
      %v1982 = vpack.c.b16 %v1978, %v1977
      %v1988 = vsel %vm1220, %v1962, 0
      %1990 = vmatprep.subr.bf16.mxu0 0
      %1991 = vmatpush1.bf16.msra.mxu0 %v1979
      %1992 = vmatprep.subr.bf16.mxu0 0
      %1993 = vmatpush1.bf16.msra.mxu0 %v1980
      %1994 = vmatprep.subr.bf16.mxu0 0
      %1995 = vmatpush1.bf16.msra.mxu0 %v1981
      %1996 = vmatprep.subr.bf16.mxu0 0
      %1997 = vmatpush1.bf16.msra.mxu0 %v1982
      %1998 = vmatprep.subr.bf16.mxu0 0
      %1999 = vmatpush1.bf16.msra.mxu0 0
      %2000 = vmatprep.subr.bf16.mxu0 0
      %2001 = vmatpush1.bf16.msra.mxu0 0
      %2002 = vmatprep.subr.bf16.mxu0 0
      %2003 = vmatpush1.bf16.msra.mxu0 0
      %2004 = vmatprep.subr.bf16.mxu0 0
      %2005 = vmatpush1.bf16.msra.mxu0 0
      %2006 = vmatprep.subr.bf16.mxu0 0
      %2007 = vmatpush1.bf16.msra.mxu0 0
      %2008 = vmatprep.subr.bf16.mxu0 0
      %2009 = vmatpush1.bf16.msra.mxu0 0
      %2010 = vmatprep.subr.bf16.mxu0 0
      %2011 = vmatpush1.bf16.msra.mxu0 0
      %2012 = vmatprep.subr.bf16.mxu0 0
      %2013 = vmatpush1.bf16.msra.mxu0 0
      %2014 = vmatprep.subr.bf16.mxu0 0
      %2015 = vmatpush1.bf16.msra.mxu0 0
      %2016 = vmatprep.subr.bf16.mxu0 0
      %2017 = vmatpush1.bf16.msra.mxu0 0
      %2018 = vmatprep.subr.bf16.mxu0 0
      %2019 = vmatpush1.bf16.msra.mxu0 0
      %2020 = vmatprep.subr.bf16.mxu0 0
      %2021 = vmatpush1.bf16.msra.mxu0 0
      %2022 = vmatprep.mubr.bf16.mxu0 0
      %2023 = vmatmul.mubr.bf16.gmra.mrb[0].mxu0 %v1988
      %v2024 = vpop.f32.mrb[0].mxu0
      %v2025 = vadd.f32 0.0, %v2024
      %v2026 = vpop.f32.mrb[0].mxu0
      %v2027 = vpop.f32.mrb[0].mxu0
      %v2028 = vpop.f32.mrb[0].mxu0
      %2029 = vdwg.mxu0
      %v2030 = vadd.f32 %v1900, %v2025
      %v2031 = vlaneseq
      %v2032 = vshrl.u32 %v2031, 7
      %v2033 = vsub.s32 0, %v2032
      %v2034 = vrot.slane %v1317, %v2033
      %v2035 = vadd.f32 %v2030, %v2034
      %v2036 = vsel %vm311, %v2035, 0.0
      %2037 = vadd.xlane.f32.xlu0 %v2036
      %v2038 = vpop.xlane.xlu0 %2037
      %v2039 = vmul.f32 %v2038, %v1113
      %v2040 = vsub.f32 %v2035, %v2039
      %v2041 = vmul.f32 %v2040, %v2040
      %v2042 = vsel %vm311, %v2041, 0.0
      %2043 = vadd.xlane.f32.xlu0 %v2042
      %v2044 = vpop.xlane.xlu0 %2043
      %v2045 = vmul.f32 %v2044, %v1113
      %v2046 = vadd.f32 %v2045, 1e-05
      %v2047 = vrsqrt.pop %v2046
      %v2048 = vmul.f32 %v2040, %v2047
      %v2049 = vlaneseq
      %v2050 = vshrl.u32 %v2049, 7
      %v2051 = vsub.s32 0, %v2050
      %v2052 = vrot.slane %v1318, %v2051
      %v2053 = vmul.f32 %v2048, %v2052
      %v2054 = vlaneseq
      %v2055 = vshrl.u32 %v2054, 7
      %v2056 = vsub.s32 0, %v2055
      %v2057 = vrot.slane %v1319, %v2056
      %v2058 = vadd.f32 %v2053, %v2057
      %s2059 = scalar_lea.vmem %s2, 48
      %v2060 = vld [vmem:[%s2059] sm:$0xf]
      %v2061 = vld [vmem:[%s2059 + $0x4] sm:$0xf]
      %v2062 = vld [vmem:[%s2059 + $0x8] sm:$0xf]
      %v2063 = vld [vmem:[%s2059 + $0xc] sm:$0xf]
      %v2064 = vpack.c.bf16 %v2058, %v2058
      %v2065 = vld [vmem:[%s3 + $0x2] sm:$0x1]
      %v2067 = vshrl.u32 %v2064, 16
      %v2069 = vrot.slane %v2067, 3
      %v2074 = vunpack.c.l.b16 %v2060
      %v2075 = vunpack.c.l.b16 %v2061
      %v2076 = vunpack.c.l.b16 %v2062
      %v2077 = vunpack.c.l.b16 %v2063
      %v2078 = vpack.c.b16 %v2075, %v2074
      %v2079 = vpack.c.b16 %v2077, %v2076
      %v2083 = vsel %vm311, %v2069, 0
      %2085 = vmatprep.subr.bf16.mxu0 0
      %2086 = vmatpush1.bf16.msra.mxu0 %v2078
      %2087 = vmatprep.subr.bf16.mxu0 0
      %2088 = vmatpush1.bf16.msra.mxu0 %v2079
      %2089 = vmatprep.subr.bf16.mxu0 0
      %2090 = vmatpush1.bf16.msra.mxu0 0
      %2091 = vmatprep.subr.bf16.mxu0 0
      %2092 = vmatpush1.bf16.msra.mxu0 0
      %2093 = vmatprep.subr.bf16.mxu0 0
      %2094 = vmatpush1.bf16.msra.mxu0 0
      %2095 = vmatprep.subr.bf16.mxu0 0
      %2096 = vmatpush1.bf16.msra.mxu0 0
      %2097 = vmatprep.subr.bf16.mxu0 0
      %2098 = vmatpush1.bf16.msra.mxu0 0
      %2099 = vmatprep.subr.bf16.mxu0 0
      %2100 = vmatpush1.bf16.msra.mxu0 0
      %2101 = vmatprep.subr.bf16.mxu0 0
      %2102 = vmatpush1.bf16.msra.mxu0 0
      %2103 = vmatprep.subr.bf16.mxu0 0
      %2104 = vmatpush1.bf16.msra.mxu0 0
      %2105 = vmatprep.subr.bf16.mxu0 0
      %2106 = vmatpush1.bf16.msra.mxu0 0
      %2107 = vmatprep.subr.bf16.mxu0 0
      %2108 = vmatpush1.bf16.msra.mxu0 0
      %2109 = vmatprep.subr.bf16.mxu0 0
      %2110 = vmatpush1.bf16.msra.mxu0 0
      %2111 = vmatprep.subr.bf16.mxu0 0
      %2112 = vmatpush1.bf16.msra.mxu0 0
      %2113 = vmatprep.subr.bf16.mxu0 0
      %2114 = vmatpush1.bf16.msra.mxu0 0
      %2115 = vmatprep.subr.bf16.mxu0 0
      %2116 = vmatpush1.bf16.msra.mxu0 0
      %2117 = vmatprep.mubr.bf16.mxu0 0
      %2118 = vmatmul.mubr.bf16.gmra.mrb[0].mxu0 %v2083
      %v2119 = vpop.f32.mrb[0].mxu0
      %v2120 = vadd.f32 %v2065, %v2119
      %v2121 = vpop.f32.mrb[0].mxu0
      %v2122 = vpop.f32.mrb[0].mxu0
      %v2123 = vpop.f32.mrb[0].mxu0
      %2124 = vdwg.mxu0
      %vm2125 = vcmask 253952
      %2126 = vst.msk [vmem:[%s285] sm:$0x1] %vm2125, %v2120
      %p2127 = scmp.lt.s32.totalorder %s18, 1
      %s2128 = scalar_select %p2127, %s18, 1
      %s2129 = scalar_lea.vmem %s7, %s2128
      // Predicated region
      $region49: #{_lambda_.1} parent=47 // pred_check
        %p2130 = pneg %p193
      $region50: #{_lambda_.1} parent=47 // pred_check_branch
        %2132 = sbr.rel (%p2130) target = $region52
      $region51: #{_lambda_.1} parent=47 // pred_region
        _
      $region52: #{_lambda_.1} parent=47 // pred_fallthru
        _
    $region48: #{_lambda_.1} parent=5 // pred_fallthru
      _
    %p2133 = scmp.le.s32.totalorder 2, %s13
    // Predicated region
    $region53: #{_lambda_.1} parent=5 // pred_check
      %p2134 = pneg %p2133
    $region54: #{_lambda_.1} parent=5 // pred_check_branch
      %2136 = sbr.rel (%p2134) target = $region56
    $region55: #{_lambda_.1} parent=5 // pred_region
      %s2137 = ssub.s32 %s13, 2
      // Predicated region
      $region57: #{_lambda_.1} parent=55 // pred_check
        %p2138 = pneg %p199
      $region58: #{_lambda_.1} parent=55 // pred_check_branch
        %2140 = sbr.rel (%p2138) target = $region60
      $region59: #{_lambda_.1} parent=55 // pred_region
        %p2141 = scmp.lt.s32.totalorder %s19, 1
        %s2142 = scalar_select %p2141, %s19, 1
        %s2143 = scalar_lea.vmem %s7, %s2142
      $region60: #{_lambda_.1} parent=55 // pred_fallthru
        _
    $region56: #{_lambda_.1} parent=5 // pred_fallthru
      _
  $region6: #{_lambda_.1} parent=0 // loop_footer
    %s17 = sadd.s32 1, %s13
  $region7: #{_lambda_.1} parent=0 // loop_footer_branch
    %12 = sbr.rel target = $region3
  $region8: #{_lambda_.1} parent=0 // loop_exit
    _

</llo_original>
